<compile_context>
chip_gen: v6e
topology: v6e:2x2x1
jax: 0.10.0
libtpu: 0.0.40
codegen_flags: <defaults>
</compile_context>

<pallas_src>
import jax
import jax.numpy as jnp
from jax.experimental import pallas as pl
from jax.experimental.pallas import tpu as pltpu


def _conv1x1_kernel(w_ref, x_ref, o_ref):
    # w_ref: (Cout, Cin)   x_ref: (Cin, S)   o_ref: (Cout, S)
    # Single K block -> no accumulator scratch, no reduction loop, direct store.
    o_ref[...] = jnp.dot(
        w_ref[...], x_ref[...],
        preferred_element_type=jnp.float32,
        precision=jax.lax.Precision.DEFAULT,   # keep the MXU off the 6-pass path
    ).astype(o_ref.dtype)


def conv2d_1x1_stride2(x_nchw, w_oihw, *, stride=2):
    """Equivalent of torch Conv2d(Cin, Cout, kernel_size=1, stride=stride, bias=False)
    on NCHW input: out[n,o,h,w] = sum_c w[o,c] * x[n,c,h*stride,w*stride]."""
    Nb, Cin, H, W = x_nchw.shape
    Cout = w_oihw.shape[0]
    w2d = w_oihw.reshape(Cout, Cin)                 # view-reshape, no transpose
    Ho = (H - 1) // stride + 1
    Wo = (W - 1) // stride + 1
    S = Ho * Wo                                     # 196 for the module's shape

    # Strided spatial subsample (glue, no FLOPs); (Nb,Cin,Ho,Wo)->(Nb,Cin,S) is
    # a contiguous reshape.  allow_input_fusion below lets XLA fold this
    # producer into the pallas_call's input DMA instead of round-tripping it
    # through HBM as a separate op.
    x_flat = x_nchw[:, :, ::stride, ::stride].reshape(Nb, Cin, S)

    cost = pl.CostEstimate(
        flops=2 * Nb * Cout * Cin * S,
        bytes_accessed=4 * (Cout * Cin + Nb * Cin * S + Nb * Cout * S),
        transcendentals=0,
    )

    # Single Cout block per batch element: K (=Cin) and N (=Cout) each fit in
    # one block, so there is no reduction loop and no output tiling.  The S
    # axis (196) is left unpadded: >=128 lanes, only the tail 68 lanes hit a
    # masked vst, which beats paying an extra pad + slice in HBM traffic.
    # TODO(synk): on v7x a 2-way Cout split marked pltpu.CORE_PARALLEL could
    # engage both TensorCores; left out until verified not to regress 1-TC chips.
    out = pl.pallas_call(
        _conv1x1_kernel,
        out_shape=jax.ShapeDtypeStruct((Nb, Cout, S), x_nchw.dtype),
        grid_spec=pltpu.PrefetchScalarGridSpec(
            num_scalar_prefetch=0,
            grid=(Nb,),                             # (1,) for the module's shape
            in_specs=[
                pl.BlockSpec((Cout, Cin), lambda b: (0, 0)),
                pl.BlockSpec((pl.Squeezed(), Cin, S), lambda b: (b, 0, 0)),
            ],
            out_specs=pl.BlockSpec((pl.Squeezed(), Cout, S), lambda b: (b, 0, 0)),
        ),
        compiler_params=pltpu.CompilerParams(
            dimension_semantics=("parallel",),
            allow_input_fusion=[False, True],       # fuse the ::2,::2 slice into x's DMA
        ),
        cost_estimate=cost,
    )(w2d, x_flat)

    # Straight back to NCHW: contiguous reshape, no slice, no transpose.
    return out.reshape(Nb, Cout, Ho, Wo)


if __name__ == "__main__":
    key = jax.random.PRNGKey(0)
    kx, kw = jax.random.split(key)

    # Module spec: Conv2d(512, 1024, kernel_size=(1,1), stride=(2,2), bias=False)
    # applied to input of shape (1, 512, 28, 28).
    x = jax.random.normal(kx, (1, 512, 28, 28), dtype=jnp.float32)
    w = (jax.random.normal(kw, (1024, 512, 1, 1), dtype=jnp.float32)
         * (1.0 / jnp.sqrt(512.0)))                 # deterministic init

    y = jax.block_until_ready(conv2d_1x1_stride2(x, w))

    # Reference: same strided-subsample channel contraction in plain JAX.
    xs = x[:, :, ::2, ::2]
    y_ref = jnp.einsum("nchw,oc->nohw", xs, w[:, :, 0, 0])
    assert y.shape == (1, 1024, 14, 14), y.shape
    assert jnp.allclose(y, y_ref, atol=1e-3, rtol=1e-3)

    print("KERNEL_OK")
</pallas_src>

<mosaic_0001>
module attributes {stable_mosaic.version = 11 : i64} {
  func.func @_conv1x1_kernel(%arg0: i32, %arg1: memref<1024x512xf32, #tpu.memory_space<vmem>>, %arg2: memref<1x512x196xf32, #tpu.memory_space<vmem>>, %arg3: memref<1x1024x196xf32, #tpu.memory_space<vmem>>) attributes {dimension_semantics = [#tpu.dimension_semantics<parallel>], iteration_bounds = array<i64: 1>, scalar_prefetch = 0 : i64, scratch_operands = 0 : i64, tpu.core_type = #tpu.core_type<tc>, window_params = [{pipeline_mode = #tpu.pipeline_mode<synchronous>, transform_indices = @transform_0, window_bounds = array<i64: 1024, 512>}, {transform_indices = @transform_1, window_bounds = array<i64: 1, 512, 196>}, {transform_indices = @transform_2, window_bounds = array<i64: 1, 1024, 196>}]} {
    %c0 = arith.constant 0 : index
    %c0_0 = arith.constant 0 : index
    %0 = vector.load %arg1[%c0, %c0_0] : memref<1024x512xf32, #tpu.memory_space<vmem>>, vector<1024x512xf32>
    %c0_1 = arith.constant 0 : index
    %c0_2 = arith.constant 0 : index
    %c0_3 = arith.constant 0 : index
    %1 = vector.load %arg2[%c0_1, %c0_2, %c0_3] : memref<1x512x196xf32, #tpu.memory_space<vmem>>, vector<1x512x196xf32>
    %2 = vector.shape_cast %1 : vector<1x512x196xf32> to vector<512x196xf32>
    %cst = arith.constant dense<0.000000e+00> : vector<1024x196xf32>
    %3 = tpu.matmul %0, %2, %cst {dimension_numbers = #tpu.dot_dimension_numbers<[1], [0], [0], [1], [0, 0, 1, 1], [], []>} : vector<1024x512xf32>, vector<512x196xf32>, vector<1024x196xf32> -> vector<1024x196xf32>
    %c0_4 = arith.constant 0 : index
    %c0_5 = arith.constant 0 : index
    %c0_6 = arith.constant 0 : index
    %4 = vector.load %arg3[%c0_4, %c0_5, %c0_6] : memref<1x1024x196xf32, #tpu.memory_space<vmem>>, vector<1x1024x196xf32>
    %5 = vector.shape_cast %4 : vector<1x1024x196xf32> to vector<1024x196xf32>
    %6 = vector.shape_cast %3 : vector<1024x196xf32> to vector<1x1024x196xf32>
    tpu.vector_store %arg3[%c0_4, %c0_5, %c0_6], %6 {strides = array<i32>} : memref<1x1024x196xf32, #tpu.memory_space<vmem>>, vector<1x1024x196xf32>,
    return
  }
  func.func @transform_0(%arg0: i32) -> (i32, i32) {
    %c0_i32 = arith.constant 0 : i32
    %c0_i32_0 = arith.constant 0 : i32
    %c0_i32_1 = arith.constant 0 : i32
    return %c0_i32, %c0_i32_0 : i32, i32
  }
  func.func @transform_1(%arg0: i32) -> (i32, i32, i32) {
    %c0_i32 = arith.constant 0 : i32
    %c0_i32_0 = arith.constant 0 : i32
    %c0_i32_1 = arith.constant 0 : i32
    return %arg0, %c0_i32, %c0_i32_0 : i32, i32, i32
  }
  func.func @transform_2(%arg0: i32) -> (i32, i32, i32) {
    %c0_i32 = arith.constant 0 : i32
    %c0_i32_0 = arith.constant 0 : i32
    %c0_i32_1 = arith.constant 0 : i32
    return %arg0, %c0_i32, %c0_i32_0 : i32, i32, i32
  }
}

</mosaic_0001>

<llo_original>
// kernel: tpu_custom_call.1
$region0: #{tpu_custom_call.1}
  #allocation0 [shape = 'u32[]', space=smem, size = 0x4, offset = 0x4, fixed_abs, tag = 'smem constant byte address 0x4 - core index']
  #allocation1 [shape = 'u32[144,128]{1,0:T(1,128)}', space=vmem, size = 0x12000, scoped, tag = 'internal scratch']
  %s0 = inlined_call_operand.hbm [shape: f32[1024,512], index: 0, kind: input, shape index: {}]
  %s1 = inlined_call_operand.vmem [shape: f32[1,512,196], index: 1, kind: input, shape index: {}]
  %s2 = inlined_call_operand.vmem [shape: f32[1,1024,196], index: 2, kind: output, shape index: {}]
  %s3 = sld [smem:[#allocation0]]
  $region22: #{tpu_custom_call.1} parent=0
    _
  %s5 = ssub.s32 1, %s3
  %s6 = scalar_select 0, %s5, %s3
  $region1: #{tpu_custom_call.1} parent=0
    #allocation2 [shape = 'u8[2097152]{0}', space=vmem, size = 0x200000, scoped, tag = 'input window, operand 0, single buffered']
    #allocation3 [shape = 's32[1]{0}', space=sflag, size = 0x4, scoped, tag = 'scoped memory for tpu_custom_call.1']
    %7 = vsyncpa [#allocation3], 0
    // Predicated region
    $region2: #{tpu_custom_call.1} parent=1 // pred_check
      _
    $region3: #{tpu_custom_call.1} parent=1 // pred_check_branch
      %9 = sbr.rel (0) target = $region5
    $region4: #{tpu_custom_call.1} parent=1 // pred_region
      %s11 = ssub.s32 65536, 65536
      %12 = vsyncadd [#allocation3], %s11
      %s13 = sshll.u32 [#allocation2], 4
      %s14 = int_to_ptr.vmem [resolvable:$true] %s13
      %19 = dma.hbm_to_vmem [thread:$0]  %s0, 65536, %s14, [#allocation3], 512, 512, 32
    $region5: #{tpu_custom_call.1} parent=1 // pred_fallthru
      _
    // Predicated region
    $region6: #{tpu_custom_call.1} parent=1 // pred_check
      _
    $region7: #{tpu_custom_call.1} parent=1 // pred_check_branch
      %21 = sbr.rel (0) target = $region9
    $region8: #{tpu_custom_call.1} parent=1 // pred_region
      _
    $region9: #{tpu_custom_call.1} parent=1 // pred_fallthru
      _
    // Predicated region
    $region10: #{tpu_custom_call.1} parent=1 // pred_check
      _
    $region11: #{tpu_custom_call.1} parent=1 // pred_check_branch
      %23 = sbr.rel (0) target = $region13
    $region12: #{tpu_custom_call.1} parent=1 // pred_region
      %24 = dma.done [#allocation3], 65536
    $region13: #{tpu_custom_call.1} parent=1 // pred_fallthru
      _
    %v25 = vld [vmem:[#allocation2] sm:$0xff]
    %v26 = vld [vmem:[#allocation2 + $0x8] sm:$0xff]
    %v27 = vld [vmem:[#allocation2 + $0x10] sm:$0xff]
    %v28 = vld [vmem:[#allocation2 + $0x18] sm:$0xff]
    %v29 = vld [vmem:[#allocation2 + $0x20] sm:$0xff]
    %v30 = vld [vmem:[#allocation2 + $0x28] sm:$0xff]
    %v31 = vld [vmem:[#allocation2 + $0x30] sm:$0xff]
    %v32 = vld [vmem:[#allocation2 + $0x38] sm:$0xff]
    %v33 = vld [vmem:[#allocation2 + $0x40] sm:$0xff]
    %v34 = vld [vmem:[#allocation2 + $0x48] sm:$0xff]
    %v35 = vld [vmem:[#allocation2 + $0x50] sm:$0xff]
    %v36 = vld [vmem:[#allocation2 + $0x58] sm:$0xff]
    %v37 = vld [vmem:[#allocation2 + $0x60] sm:$0xff]
    %v38 = vld [vmem:[#allocation2 + $0x68] sm:$0xff]
    %v39 = vld [vmem:[#allocation2 + $0x70] sm:$0xff]
    %v40 = vld [vmem:[#allocation2 + $0x78] sm:$0xff]
    %v41 = vld [vmem:[#allocation2 + $0x80] sm:$0xff]
    %v42 = vld [vmem:[#allocation2 + $0x88] sm:$0xff]
    %v43 = vld [vmem:[#allocation2 + $0x90] sm:$0xff]
    %v44 = vld [vmem:[#allocation2 + $0x98] sm:$0xff]
    %v45 = vld [vmem:[#allocation2 + $0xa0] sm:$0xff]
    %v46 = vld [vmem:[#allocation2 + $0xa8] sm:$0xff]
    %v47 = vld [vmem:[#allocation2 + $0xb0] sm:$0xff]
    %v48 = vld [vmem:[#allocation2 + $0xb8] sm:$0xff]
    %v49 = vld [vmem:[#allocation2 + $0xc0] sm:$0xff]
    %v50 = vld [vmem:[#allocation2 + $0xc8] sm:$0xff]
    %v51 = vld [vmem:[#allocation2 + $0xd0] sm:$0xff]
    %v52 = vld [vmem:[#allocation2 + $0xd8] sm:$0xff]
    %v53 = vld [vmem:[#allocation2 + $0xe0] sm:$0xff]
    %v54 = vld [vmem:[#allocation2 + $0xe8] sm:$0xff]
    %v55 = vld [vmem:[#allocation2 + $0xf0] sm:$0xff]
    %v56 = vld [vmem:[#allocation2 + $0xf8] sm:$0xff]
    %v57 = vld [vmem:[#allocation2 + $0x100] sm:$0xff]
    %v58 = vld [vmem:[#allocation2 + $0x108] sm:$0xff]
    %v59 = vld [vmem:[#allocation2 + $0x110] sm:$0xff]
    %v60 = vld [vmem:[#allocation2 + $0x118] sm:$0xff]
    %v61 = vld [vmem:[#allocation2 + $0x120] sm:$0xff]
    %v62 = vld [vmem:[#allocation2 + $0x128] sm:$0xff]
    %v63 = vld [vmem:[#allocation2 + $0x130] sm:$0xff]
    %v64 = vld [vmem:[#allocation2 + $0x138] sm:$0xff]
    %v65 = vld [vmem:[#allocation2 + $0x140] sm:$0xff]
    %v66 = vld [vmem:[#allocation2 + $0x148] sm:$0xff]
    %v67 = vld [vmem:[#allocation2 + $0x150] sm:$0xff]
    %v68 = vld [vmem:[#allocation2 + $0x158] sm:$0xff]
    %v69 = vld [vmem:[#allocation2 + $0x160] sm:$0xff]
    %v70 = vld [vmem:[#allocation2 + $0x168] sm:$0xff]
    %v71 = vld [vmem:[#allocation2 + $0x170] sm:$0xff]
    %v72 = vld [vmem:[#allocation2 + $0x178] sm:$0xff]
    %v73 = vld [vmem:[#allocation2 + $0x180] sm:$0xff]
    %v74 = vld [vmem:[#allocation2 + $0x188] sm:$0xff]
    %v75 = vld [vmem:[#allocation2 + $0x190] sm:$0xff]
    %v76 = vld [vmem:[#allocation2 + $0x198] sm:$0xff]
    %v77 = vld [vmem:[#allocation2 + $0x1a0] sm:$0xff]
    %v78 = vld [vmem:[#allocation2 + $0x1a8] sm:$0xff]
    %v79 = vld [vmem:[#allocation2 + $0x1b0] sm:$0xff]
    %v80 = vld [vmem:[#allocation2 + $0x1b8] sm:$0xff]
    %v81 = vld [vmem:[#allocation2 + $0x1c0] sm:$0xff]
    %v82 = vld [vmem:[#allocation2 + $0x1c8] sm:$0xff]
    %v83 = vld [vmem:[#allocation2 + $0x1d0] sm:$0xff]
    %v84 = vld [vmem:[#allocation2 + $0x1d8] sm:$0xff]
    %v85 = vld [vmem:[#allocation2 + $0x1e0] sm:$0xff]
    %v86 = vld [vmem:[#allocation2 + $0x1e8] sm:$0xff]
    %v87 = vld [vmem:[#allocation2 + $0x1f0] sm:$0xff]
    %v88 = vld [vmem:[#allocation2 + $0x1f8] sm:$0xff]
    %v89 = vld [vmem:[#allocation2 + $0x200] sm:$0xff]
    %v90 = vld [vmem:[#allocation2 + $0x208] sm:$0xff]
    %v91 = vld [vmem:[#allocation2 + $0x210] sm:$0xff]
    %v92 = vld [vmem:[#allocation2 + $0x218] sm:$0xff]
    %v93 = vld [vmem:[#allocation2 + $0x220] sm:$0xff]
    %v94 = vld [vmem:[#allocation2 + $0x228] sm:$0xff]
    %v95 = vld [vmem:[#allocation2 + $0x230] sm:$0xff]
    %v96 = vld [vmem:[#allocation2 + $0x238] sm:$0xff]
    %v97 = vld [vmem:[#allocation2 + $0x240] sm:$0xff]
    %v98 = vld [vmem:[#allocation2 + $0x248] sm:$0xff]
    %v99 = vld [vmem:[#allocation2 + $0x250] sm:$0xff]
    %v100 = vld [vmem:[#allocation2 + $0x258] sm:$0xff]
    %v101 = vld [vmem:[#allocation2 + $0x260] sm:$0xff]
    %v102 = vld [vmem:[#allocation2 + $0x268] sm:$0xff]
    %v103 = vld [vmem:[#allocation2 + $0x270] sm:$0xff]
    %v104 = vld [vmem:[#allocation2 + $0x278] sm:$0xff]
    %v105 = vld [vmem:[#allocation2 + $0x280] sm:$0xff]
    %v106 = vld [vmem:[#allocation2 + $0x288] sm:$0xff]
    %v107 = vld [vmem:[#allocation2 + $0x290] sm:$0xff]
    %v108 = vld [vmem:[#allocation2 + $0x298] sm:$0xff]
    %v109 = vld [vmem:[#allocation2 + $0x2a0] sm:$0xff]
    %v110 = vld [vmem:[#allocation2 + $0x2a8] sm:$0xff]
    %v111 = vld [vmem:[#allocation2 + $0x2b0] sm:$0xff]
    %v112 = vld [vmem:[#allocation2 + $0x2b8] sm:$0xff]
    %v113 = vld [vmem:[#allocation2 + $0x2c0] sm:$0xff]
    %v114 = vld [vmem:[#allocation2 + $0x2c8] sm:$0xff]
    %v115 = vld [vmem:[#allocation2 + $0x2d0] sm:$0xff]
    %v116 = vld [vmem:[#allocation2 + $0x2d8] sm:$0xff]
    %v117 = vld [vmem:[#allocation2 + $0x2e0] sm:$0xff]
    %v118 = vld [vmem:[#allocation2 + $0x2e8] sm:$0xff]
    %v119 = vld [vmem:[#allocation2 + $0x2f0] sm:$0xff]
    %v120 = vld [vmem:[#allocation2 + $0x2f8] sm:$0xff]
    %v121 = vld [vmem:[#allocation2 + $0x300] sm:$0xff]
    %v122 = vld [vmem:[#allocation2 + $0x308] sm:$0xff]
    %v123 = vld [vmem:[#allocation2 + $0x310] sm:$0xff]
    %v124 = vld [vmem:[#allocation2 + $0x318] sm:$0xff]
    %v125 = vld [vmem:[#allocation2 + $0x320] sm:$0xff]
    %v126 = vld [vmem:[#allocation2 + $0x328] sm:$0xff]
    %v127 = vld [vmem:[#allocation2 + $0x330] sm:$0xff]
    %v128 = vld [vmem:[#allocation2 + $0x338] sm:$0xff]
    %v129 = vld [vmem:[#allocation2 + $0x340] sm:$0xff]
    %v130 = vld [vmem:[#allocation2 + $0x348] sm:$0xff]
    %v131 = vld [vmem:[#allocation2 + $0x350] sm:$0xff]
    %v132 = vld [vmem:[#allocation2 + $0x358] sm:$0xff]
    %v133 = vld [vmem:[#allocation2 + $0x360] sm:$0xff]
    %v134 = vld [vmem:[#allocation2 + $0x368] sm:$0xff]
    %v135 = vld [vmem:[#allocation2 + $0x370] sm:$0xff]
    %v136 = vld [vmem:[#allocation2 + $0x378] sm:$0xff]
    %v137 = vld [vmem:[#allocation2 + $0x380] sm:$0xff]
    %v138 = vld [vmem:[#allocation2 + $0x388] sm:$0xff]
    %v139 = vld [vmem:[#allocation2 + $0x390] sm:$0xff]
    %v140 = vld [vmem:[#allocation2 + $0x398] sm:$0xff]
    %v141 = vld [vmem:[#allocation2 + $0x3a0] sm:$0xff]
    %v142 = vld [vmem:[#allocation2 + $0x3a8] sm:$0xff]
    %v143 = vld [vmem:[#allocation2 + $0x3b0] sm:$0xff]
    %v144 = vld [vmem:[#allocation2 + $0x3b8] sm:$0xff]
    %v145 = vld [vmem:[#allocation2 + $0x3c0] sm:$0xff]
    %v146 = vld [vmem:[#allocation2 + $0x3c8] sm:$0xff]
    %v147 = vld [vmem:[#allocation2 + $0x3d0] sm:$0xff]
    %v148 = vld [vmem:[#allocation2 + $0x3d8] sm:$0xff]
    %v149 = vld [vmem:[#allocation2 + $0x3e0] sm:$0xff]
    %v150 = vld [vmem:[#allocation2 + $0x3e8] sm:$0xff]
    %v151 = vld [vmem:[#allocation2 + $0x3f0] sm:$0xff]
    %v152 = vld [vmem:[#allocation2 + $0x3f8] sm:$0xff]
    %v153 = vld [vmem:[#allocation2 + $0x400] sm:$0xff]
    %v154 = vld [vmem:[#allocation2 + $0x408] sm:$0xff]
    %v155 = vld [vmem:[#allocation2 + $0x410] sm:$0xff]
    %v156 = vld [vmem:[#allocation2 + $0x418] sm:$0xff]
    %v157 = vld [vmem:[#allocation2 + $0x420] sm:$0xff]
    %v158 = vld [vmem:[#allocation2 + $0x428] sm:$0xff]
    %v159 = vld [vmem:[#allocation2 + $0x430] sm:$0xff]
    %v160 = vld [vmem:[#allocation2 + $0x438] sm:$0xff]
    %v161 = vld [vmem:[#allocation2 + $0x440] sm:$0xff]
    %v162 = vld [vmem:[#allocation2 + $0x448] sm:$0xff]
    %v163 = vld [vmem:[#allocation2 + $0x450] sm:$0xff]
    %v164 = vld [vmem:[#allocation2 + $0x458] sm:$0xff]
    %v165 = vld [vmem:[#allocation2 + $0x460] sm:$0xff]
    %v166 = vld [vmem:[#allocation2 + $0x468] sm:$0xff]
    %v167 = vld [vmem:[#allocation2 + $0x470] sm:$0xff]
    %v168 = vld [vmem:[#allocation2 + $0x478] sm:$0xff]
    %v169 = vld [vmem:[#allocation2 + $0x480] sm:$0xff]
    %v170 = vld [vmem:[#allocation2 + $0x488] sm:$0xff]
    %v171 = vld [vmem:[#allocation2 + $0x490] sm:$0xff]
    %v172 = vld [vmem:[#allocation2 + $0x498] sm:$0xff]
    %v173 = vld [vmem:[#allocation2 + $0x4a0] sm:$0xff]
    %v174 = vld [vmem:[#allocation2 + $0x4a8] sm:$0xff]
    %v175 = vld [vmem:[#allocation2 + $0x4b0] sm:$0xff]
    %v176 = vld [vmem:[#allocation2 + $0x4b8] sm:$0xff]
    %v177 = vld [vmem:[#allocation2 + $0x4c0] sm:$0xff]
    %v178 = vld [vmem:[#allocation2 + $0x4c8] sm:$0xff]
    %v179 = vld [vmem:[#allocation2 + $0x4d0] sm:$0xff]
    %v180 = vld [vmem:[#allocation2 + $0x4d8] sm:$0xff]
    %v181 = vld [vmem:[#allocation2 + $0x4e0] sm:$0xff]
    %v182 = vld [vmem:[#allocation2 + $0x4e8] sm:$0xff]
    %v183 = vld [vmem:[#allocation2 + $0x4f0] sm:$0xff]
    %v184 = vld [vmem:[#allocation2 + $0x4f8] sm:$0xff]
    %v185 = vld [vmem:[#allocation2 + $0x500] sm:$0xff]
    %v186 = vld [vmem:[#allocation2 + $0x508] sm:$0xff]
    %v187 = vld [vmem:[#allocation2 + $0x510] sm:$0xff]
    %v188 = vld [vmem:[#allocation2 + $0x518] sm:$0xff]
    %v189 = vld [vmem:[#allocation2 + $0x520] sm:$0xff]
    %v190 = vld [vmem:[#allocation2 + $0x528] sm:$0xff]
    %v191 = vld [vmem:[#allocation2 + $0x530] sm:$0xff]
    %v192 = vld [vmem:[#allocation2 + $0x538] sm:$0xff]
    %v193 = vld [vmem:[#allocation2 + $0x540] sm:$0xff]
    %v194 = vld [vmem:[#allocation2 + $0x548] sm:$0xff]
    %v195 = vld [vmem:[#allocation2 + $0x550] sm:$0xff]
    %v196 = vld [vmem:[#allocation2 + $0x558] sm:$0xff]
    %v197 = vld [vmem:[#allocation2 + $0x560] sm:$0xff]
    %v198 = vld [vmem:[#allocation2 + $0x568] sm:$0xff]
    %v199 = vld [vmem:[#allocation2 + $0x570] sm:$0xff]
    %v200 = vld [vmem:[#allocation2 + $0x578] sm:$0xff]
    %v201 = vld [vmem:[#allocation2 + $0x580] sm:$0xff]
    %v202 = vld [vmem:[#allocation2 + $0x588] sm:$0xff]
    %v203 = vld [vmem:[#allocation2 + $0x590] sm:$0xff]
    %v204 = vld [vmem:[#allocation2 + $0x598] sm:$0xff]
    %v205 = vld [vmem:[#allocation2 + $0x5a0] sm:$0xff]
    %v206 = vld [vmem:[#allocation2 + $0x5a8] sm:$0xff]
    %v207 = vld [vmem:[#allocation2 + $0x5b0] sm:$0xff]
    %v208 = vld [vmem:[#allocation2 + $0x5b8] sm:$0xff]
    %v209 = vld [vmem:[#allocation2 + $0x5c0] sm:$0xff]
    %v210 = vld [vmem:[#allocation2 + $0x5c8] sm:$0xff]
    %v211 = vld [vmem:[#allocation2 + $0x5d0] sm:$0xff]
    %v212 = vld [vmem:[#allocation2 + $0x5d8] sm:$0xff]
    %v213 = vld [vmem:[#allocation2 + $0x5e0] sm:$0xff]
    %v214 = vld [vmem:[#allocation2 + $0x5e8] sm:$0xff]
    %v215 = vld [vmem:[#allocation2 + $0x5f0] sm:$0xff]
    %v216 = vld [vmem:[#allocation2 + $0x5f8] sm:$0xff]
    %v217 = vld [vmem:[#allocation2 + $0x600] sm:$0xff]
    %v218 = vld [vmem:[#allocation2 + $0x608] sm:$0xff]
    %v219 = vld [vmem:[#allocation2 + $0x610] sm:$0xff]
    %v220 = vld [vmem:[#allocation2 + $0x618] sm:$0xff]
    %v221 = vld [vmem:[#allocation2 + $0x620] sm:$0xff]
    %v222 = vld [vmem:[#allocation2 + $0x628] sm:$0xff]
    %v223 = vld [vmem:[#allocation2 + $0x630] sm:$0xff]
    %v224 = vld [vmem:[#allocation2 + $0x638] sm:$0xff]
    %v225 = vld [vmem:[#allocation2 + $0x640] sm:$0xff]
    %v226 = vld [vmem:[#allocation2 + $0x648] sm:$0xff]
    %v227 = vld [vmem:[#allocation2 + $0x650] sm:$0xff]
    %v228 = vld [vmem:[#allocation2 + $0x658] sm:$0xff]
    %v229 = vld [vmem:[#allocation2 + $0x660] sm:$0xff]
    %v230 = vld [vmem:[#allocation2 + $0x668] sm:$0xff]
    %v231 = vld [vmem:[#allocation2 + $0x670] sm:$0xff]
    %v232 = vld [vmem:[#allocation2 + $0x678] sm:$0xff]
    %v233 = vld [vmem:[#allocation2 + $0x680] sm:$0xff]
    %v234 = vld [vmem:[#allocation2 + $0x688] sm:$0xff]
    %v235 = vld [vmem:[#allocation2 + $0x690] sm:$0xff]
    %v236 = vld [vmem:[#allocation2 + $0x698] sm:$0xff]
    %v237 = vld [vmem:[#allocation2 + $0x6a0] sm:$0xff]
    %v238 = vld [vmem:[#allocation2 + $0x6a8] sm:$0xff]
    %v239 = vld [vmem:[#allocation2 + $0x6b0] sm:$0xff]
    %v240 = vld [vmem:[#allocation2 + $0x6b8] sm:$0xff]
    %v241 = vld [vmem:[#allocation2 + $0x6c0] sm:$0xff]
    %v242 = vld [vmem:[#allocation2 + $0x6c8] sm:$0xff]
    %v243 = vld [vmem:[#allocation2 + $0x6d0] sm:$0xff]
    %v244 = vld [vmem:[#allocation2 + $0x6d8] sm:$0xff]
    %v245 = vld [vmem:[#allocation2 + $0x6e0] sm:$0xff]
    %v246 = vld [vmem:[#allocation2 + $0x6e8] sm:$0xff]
    %v247 = vld [vmem:[#allocation2 + $0x6f0] sm:$0xff]
    %v248 = vld [vmem:[#allocation2 + $0x6f8] sm:$0xff]
    %v249 = vld [vmem:[#allocation2 + $0x700] sm:$0xff]
    %v250 = vld [vmem:[#allocation2 + $0x708] sm:$0xff]
    %v251 = vld [vmem:[#allocation2 + $0x710] sm:$0xff]
    %v252 = vld [vmem:[#allocation2 + $0x718] sm:$0xff]
    %v253 = vld [vmem:[#allocation2 + $0x720] sm:$0xff]
    %v254 = vld [vmem:[#allocation2 + $0x728] sm:$0xff]
    %v255 = vld [vmem:[#allocation2 + $0x730] sm:$0xff]
    %v256 = vld [vmem:[#allocation2 + $0x738] sm:$0xff]
    %v257 = vld [vmem:[#allocation2 + $0x740] sm:$0xff]
    %v258 = vld [vmem:[#allocation2 + $0x748] sm:$0xff]
    %v259 = vld [vmem:[#allocation2 + $0x750] sm:$0xff]
    %v260 = vld [vmem:[#allocation2 + $0x758] sm:$0xff]
    %v261 = vld [vmem:[#allocation2 + $0x760] sm:$0xff]
    %v262 = vld [vmem:[#allocation2 + $0x768] sm:$0xff]
    %v263 = vld [vmem:[#allocation2 + $0x770] sm:$0xff]
    %v264 = vld [vmem:[#allocation2 + $0x778] sm:$0xff]
    %v265 = vld [vmem:[#allocation2 + $0x780] sm:$0xff]
    %v266 = vld [vmem:[#allocation2 + $0x788] sm:$0xff]
    %v267 = vld [vmem:[#allocation2 + $0x790] sm:$0xff]
    %v268 = vld [vmem:[#allocation2 + $0x798] sm:$0xff]
    %v269 = vld [vmem:[#allocation2 + $0x7a0] sm:$0xff]
    %v270 = vld [vmem:[#allocation2 + $0x7a8] sm:$0xff]
    %v271 = vld [vmem:[#allocation2 + $0x7b0] sm:$0xff]
    %v272 = vld [vmem:[#allocation2 + $0x7b8] sm:$0xff]
    %v273 = vld [vmem:[#allocation2 + $0x7c0] sm:$0xff]
    %v274 = vld [vmem:[#allocation2 + $0x7c8] sm:$0xff]
    %v275 = vld [vmem:[#allocation2 + $0x7d0] sm:$0xff]
    %v276 = vld [vmem:[#allocation2 + $0x7d8] sm:$0xff]
    %v277 = vld [vmem:[#allocation2 + $0x7e0] sm:$0xff]
    %v278 = vld [vmem:[#allocation2 + $0x7e8] sm:$0xff]
    %v279 = vld [vmem:[#allocation2 + $0x7f0] sm:$0xff]
    %v280 = vld [vmem:[#allocation2 + $0x7f8] sm:$0xff]
    %v281 = vld [vmem:[#allocation2 + $0x800] sm:$0xff]
    %v282 = vld [vmem:[#allocation2 + $0x808] sm:$0xff]
    %v283 = vld [vmem:[#allocation2 + $0x810] sm:$0xff]
    %v284 = vld [vmem:[#allocation2 + $0x818] sm:$0xff]
    %v285 = vld [vmem:[#allocation2 + $0x820] sm:$0xff]
    %v286 = vld [vmem:[#allocation2 + $0x828] sm:$0xff]
    %v287 = vld [vmem:[#allocation2 + $0x830] sm:$0xff]
    %v288 = vld [vmem:[#allocation2 + $0x838] sm:$0xff]
    %v289 = vld [vmem:[#allocation2 + $0x840] sm:$0xff]
    %v290 = vld [vmem:[#allocation2 + $0x848] sm:$0xff]
    %v291 = vld [vmem:[#allocation2 + $0x850] sm:$0xff]
    %v292 = vld [vmem:[#allocation2 + $0x858] sm:$0xff]
    %v293 = vld [vmem:[#allocation2 + $0x860] sm:$0xff]
    %v294 = vld [vmem:[#allocation2 + $0x868] sm:$0xff]
    %v295 = vld [vmem:[#allocation2 + $0x870] sm:$0xff]
    %v296 = vld [vmem:[#allocation2 + $0x878] sm:$0xff]
    %v297 = vld [vmem:[#allocation2 + $0x880] sm:$0xff]
    %v298 = vld [vmem:[#allocation2 + $0x888] sm:$0xff]
    %v299 = vld [vmem:[#allocation2 + $0x890] sm:$0xff]
    %v300 = vld [vmem:[#allocation2 + $0x898] sm:$0xff]
    %v301 = vld [vmem:[#allocation2 + $0x8a0] sm:$0xff]
    %v302 = vld [vmem:[#allocation2 + $0x8a8] sm:$0xff]
    %v303 = vld [vmem:[#allocation2 + $0x8b0] sm:$0xff]
    %v304 = vld [vmem:[#allocation2 + $0x8b8] sm:$0xff]
    %v305 = vld [vmem:[#allocation2 + $0x8c0] sm:$0xff]
    %v306 = vld [vmem:[#allocation2 + $0x8c8] sm:$0xff]
    %v307 = vld [vmem:[#allocation2 + $0x8d0] sm:$0xff]
    %v308 = vld [vmem:[#allocation2 + $0x8d8] sm:$0xff]
    %v309 = vld [vmem:[#allocation2 + $0x8e0] sm:$0xff]
    %v310 = vld [vmem:[#allocation2 + $0x8e8] sm:$0xff]
    %v311 = vld [vmem:[#allocation2 + $0x8f0] sm:$0xff]
    %v312 = vld [vmem:[#allocation2 + $0x8f8] sm:$0xff]
    %v313 = vld [vmem:[#allocation2 + $0x900] sm:$0xff]
    %v314 = vld [vmem:[#allocation2 + $0x908] sm:$0xff]
    %v315 = vld [vmem:[#allocation2 + $0x910] sm:$0xff]
    %v316 = vld [vmem:[#allocation2 + $0x918] sm:$0xff]
    %v317 = vld [vmem:[#allocation2 + $0x920] sm:$0xff]
    %v318 = vld [vmem:[#allocation2 + $0x928] sm:$0xff]
    %v319 = vld [vmem:[#allocation2 + $0x930] sm:$0xff]
    %v320 = vld [vmem:[#allocation2 + $0x938] sm:$0xff]
    %v321 = vld [vmem:[#allocation2 + $0x940] sm:$0xff]
    %v322 = vld [vmem:[#allocation2 + $0x948] sm:$0xff]
    %v323 = vld [vmem:[#allocation2 + $0x950] sm:$0xff]
    %v324 = vld [vmem:[#allocation2 + $0x958] sm:$0xff]
    %v325 = vld [vmem:[#allocation2 + $0x960] sm:$0xff]
    %v326 = vld [vmem:[#allocation2 + $0x968] sm:$0xff]
    %v327 = vld [vmem:[#allocation2 + $0x970] sm:$0xff]
    %v328 = vld [vmem:[#allocation2 + $0x978] sm:$0xff]
    %v329 = vld [vmem:[#allocation2 + $0x980] sm:$0xff]
    %v330 = vld [vmem:[#allocation2 + $0x988] sm:$0xff]
    %v331 = vld [vmem:[#allocation2 + $0x990] sm:$0xff]
    %v332 = vld [vmem:[#allocation2 + $0x998] sm:$0xff]
    %v333 = vld [vmem:[#allocation2 + $0x9a0] sm:$0xff]
    %v334 = vld [vmem:[#allocation2 + $0x9a8] sm:$0xff]
    %v335 = vld [vmem:[#allocation2 + $0x9b0] sm:$0xff]
    %v336 = vld [vmem:[#allocation2 + $0x9b8] sm:$0xff]
    %v337 = vld [vmem:[#allocation2 + $0x9c0] sm:$0xff]
    %v338 = vld [vmem:[#allocation2 + $0x9c8] sm:$0xff]
    %v339 = vld [vmem:[#allocation2 + $0x9d0] sm:$0xff]
    %v340 = vld [vmem:[#allocation2 + $0x9d8] sm:$0xff]
    %v341 = vld [vmem:[#allocation2 + $0x9e0] sm:$0xff]
    %v342 = vld [vmem:[#allocation2 + $0x9e8] sm:$0xff]
    %v343 = vld [vmem:[#allocation2 + $0x9f0] sm:$0xff]
    %v344 = vld [vmem:[#allocation2 + $0x9f8] sm:$0xff]
    %v345 = vld [vmem:[#allocation2 + $0xa00] sm:$0xff]
    %v346 = vld [vmem:[#allocation2 + $0xa08] sm:$0xff]
    %v347 = vld [vmem:[#allocation2 + $0xa10] sm:$0xff]
    %v348 = vld [vmem:[#allocation2 + $0xa18] sm:$0xff]
    %v349 = vld [vmem:[#allocation2 + $0xa20] sm:$0xff]
    %v350 = vld [vmem:[#allocation2 + $0xa28] sm:$0xff]
    %v351 = vld [vmem:[#allocation2 + $0xa30] sm:$0xff]
    %v352 = vld [vmem:[#allocation2 + $0xa38] sm:$0xff]
    %v353 = vld [vmem:[#allocation2 + $0xa40] sm:$0xff]
    %v354 = vld [vmem:[#allocation2 + $0xa48] sm:$0xff]
    %v355 = vld [vmem:[#allocation2 + $0xa50] sm:$0xff]
    %v356 = vld [vmem:[#allocation2 + $0xa58] sm:$0xff]
    %v357 = vld [vmem:[#allocation2 + $0xa60] sm:$0xff]
    %v358 = vld [vmem:[#allocation2 + $0xa68] sm:$0xff]
    %v359 = vld [vmem:[#allocation2 + $0xa70] sm:$0xff]
    %v360 = vld [vmem:[#allocation2 + $0xa78] sm:$0xff]
    %v361 = vld [vmem:[#allocation2 + $0xa80] sm:$0xff]
    %v362 = vld [vmem:[#allocation2 + $0xa88] sm:$0xff]
    %v363 = vld [vmem:[#allocation2 + $0xa90] sm:$0xff]
    %v364 = vld [vmem:[#allocation2 + $0xa98] sm:$0xff]
    %v365 = vld [vmem:[#allocation2 + $0xaa0] sm:$0xff]
    %v366 = vld [vmem:[#allocation2 + $0xaa8] sm:$0xff]
    %v367 = vld [vmem:[#allocation2 + $0xab0] sm:$0xff]
    %v368 = vld [vmem:[#allocation2 + $0xab8] sm:$0xff]
    %v369 = vld [vmem:[#allocation2 + $0xac0] sm:$0xff]
    %v370 = vld [vmem:[#allocation2 + $0xac8] sm:$0xff]
    %v371 = vld [vmem:[#allocation2 + $0xad0] sm:$0xff]
    %v372 = vld [vmem:[#allocation2 + $0xad8] sm:$0xff]
    %v373 = vld [vmem:[#allocation2 + $0xae0] sm:$0xff]
    %v374 = vld [vmem:[#allocation2 + $0xae8] sm:$0xff]
    %v375 = vld [vmem:[#allocation2 + $0xaf0] sm:$0xff]
    %v376 = vld [vmem:[#allocation2 + $0xaf8] sm:$0xff]
    %v377 = vld [vmem:[#allocation2 + $0xb00] sm:$0xff]
    %v378 = vld [vmem:[#allocation2 + $0xb08] sm:$0xff]
    %v379 = vld [vmem:[#allocation2 + $0xb10] sm:$0xff]
    %v380 = vld [vmem:[#allocation2 + $0xb18] sm:$0xff]
    %v381 = vld [vmem:[#allocation2 + $0xb20] sm:$0xff]
    %v382 = vld [vmem:[#allocation2 + $0xb28] sm:$0xff]
    %v383 = vld [vmem:[#allocation2 + $0xb30] sm:$0xff]
    %v384 = vld [vmem:[#allocation2 + $0xb38] sm:$0xff]
    %v385 = vld [vmem:[#allocation2 + $0xb40] sm:$0xff]
    %v386 = vld [vmem:[#allocation2 + $0xb48] sm:$0xff]
    %v387 = vld [vmem:[#allocation2 + $0xb50] sm:$0xff]
    %v388 = vld [vmem:[#allocation2 + $0xb58] sm:$0xff]
    %v389 = vld [vmem:[#allocation2 + $0xb60] sm:$0xff]
    %v390 = vld [vmem:[#allocation2 + $0xb68] sm:$0xff]
    %v391 = vld [vmem:[#allocation2 + $0xb70] sm:$0xff]
    %v392 = vld [vmem:[#allocation2 + $0xb78] sm:$0xff]
    %v393 = vld [vmem:[#allocation2 + $0xb80] sm:$0xff]
    %v394 = vld [vmem:[#allocation2 + $0xb88] sm:$0xff]
    %v395 = vld [vmem:[#allocation2 + $0xb90] sm:$0xff]
    %v396 = vld [vmem:[#allocation2 + $0xb98] sm:$0xff]
    %v397 = vld [vmem:[#allocation2 + $0xba0] sm:$0xff]
    %v398 = vld [vmem:[#allocation2 + $0xba8] sm:$0xff]
    %v399 = vld [vmem:[#allocation2 + $0xbb0] sm:$0xff]
    %v400 = vld [vmem:[#allocation2 + $0xbb8] sm:$0xff]
    %v401 = vld [vmem:[#allocation2 + $0xbc0] sm:$0xff]
    %v402 = vld [vmem:[#allocation2 + $0xbc8] sm:$0xff]
    %v403 = vld [vmem:[#allocation2 + $0xbd0] sm:$0xff]
    %v404 = vld [vmem:[#allocation2 + $0xbd8] sm:$0xff]
    %v405 = vld [vmem:[#allocation2 + $0xbe0] sm:$0xff]
    %v406 = vld [vmem:[#allocation2 + $0xbe8] sm:$0xff]
    %v407 = vld [vmem:[#allocation2 + $0xbf0] sm:$0xff]
    %v408 = vld [vmem:[#allocation2 + $0xbf8] sm:$0xff]
    %v409 = vld [vmem:[#allocation2 + $0xc00] sm:$0xff]
    %v410 = vld [vmem:[#allocation2 + $0xc08] sm:$0xff]
    %v411 = vld [vmem:[#allocation2 + $0xc10] sm:$0xff]
    %v412 = vld [vmem:[#allocation2 + $0xc18] sm:$0xff]
    %v413 = vld [vmem:[#allocation2 + $0xc20] sm:$0xff]
    %v414 = vld [vmem:[#allocation2 + $0xc28] sm:$0xff]
    %v415 = vld [vmem:[#allocation2 + $0xc30] sm:$0xff]
    %v416 = vld [vmem:[#allocation2 + $0xc38] sm:$0xff]
    %v417 = vld [vmem:[#allocation2 + $0xc40] sm:$0xff]
    %v418 = vld [vmem:[#allocation2 + $0xc48] sm:$0xff]
    %v419 = vld [vmem:[#allocation2 + $0xc50] sm:$0xff]
    %v420 = vld [vmem:[#allocation2 + $0xc58] sm:$0xff]
    %v421 = vld [vmem:[#allocation2 + $0xc60] sm:$0xff]
    %v422 = vld [vmem:[#allocation2 + $0xc68] sm:$0xff]
    %v423 = vld [vmem:[#allocation2 + $0xc70] sm:$0xff]
    %v424 = vld [vmem:[#allocation2 + $0xc78] sm:$0xff]
    %v425 = vld [vmem:[#allocation2 + $0xc80] sm:$0xff]
    %v426 = vld [vmem:[#allocation2 + $0xc88] sm:$0xff]
    %v427 = vld [vmem:[#allocation2 + $0xc90] sm:$0xff]
    %v428 = vld [vmem:[#allocation2 + $0xc98] sm:$0xff]
    %v429 = vld [vmem:[#allocation2 + $0xca0] sm:$0xff]
    %v430 = vld [vmem:[#allocation2 + $0xca8] sm:$0xff]
    %v431 = vld [vmem:[#allocation2 + $0xcb0] sm:$0xff]
    %v432 = vld [vmem:[#allocation2 + $0xcb8] sm:$0xff]
    %v433 = vld [vmem:[#allocation2 + $0xcc0] sm:$0xff]
    %v434 = vld [vmem:[#allocation2 + $0xcc8] sm:$0xff]
    %v435 = vld [vmem:[#allocation2 + $0xcd0] sm:$0xff]
    %v436 = vld [vmem:[#allocation2 + $0xcd8] sm:$0xff]
    %v437 = vld [vmem:[#allocation2 + $0xce0] sm:$0xff]
    %v438 = vld [vmem:[#allocation2 + $0xce8] sm:$0xff]
    %v439 = vld [vmem:[#allocation2 + $0xcf0] sm:$0xff]
    %v440 = vld [vmem:[#allocation2 + $0xcf8] sm:$0xff]
    %v441 = vld [vmem:[#allocation2 + $0xd00] sm:$0xff]
    %v442 = vld [vmem:[#allocation2 + $0xd08] sm:$0xff]
    %v443 = vld [vmem:[#allocation2 + $0xd10] sm:$0xff]
    %v444 = vld [vmem:[#allocation2 + $0xd18] sm:$0xff]
    %v445 = vld [vmem:[#allocation2 + $0xd20] sm:$0xff]
    %v446 = vld [vmem:[#allocation2 + $0xd28] sm:$0xff]
    %v447 = vld [vmem:[#allocation2 + $0xd30] sm:$0xff]
    %v448 = vld [vmem:[#allocation2 + $0xd38] sm:$0xff]
    %v449 = vld [vmem:[#allocation2 + $0xd40] sm:$0xff]
    %v450 = vld [vmem:[#allocation2 + $0xd48] sm:$0xff]
    %v451 = vld [vmem:[#allocation2 + $0xd50] sm:$0xff]
    %v452 = vld [vmem:[#allocation2 + $0xd58] sm:$0xff]
    %v453 = vld [vmem:[#allocation2 + $0xd60] sm:$0xff]
    %v454 = vld [vmem:[#allocation2 + $0xd68] sm:$0xff]
    %v455 = vld [vmem:[#allocation2 + $0xd70] sm:$0xff]
    %v456 = vld [vmem:[#allocation2 + $0xd78] sm:$0xff]
    %v457 = vld [vmem:[#allocation2 + $0xd80] sm:$0xff]
    %v458 = vld [vmem:[#allocation2 + $0xd88] sm:$0xff]
    %v459 = vld [vmem:[#allocation2 + $0xd90] sm:$0xff]
    %v460 = vld [vmem:[#allocation2 + $0xd98] sm:$0xff]
    %v461 = vld [vmem:[#allocation2 + $0xda0] sm:$0xff]
    %v462 = vld [vmem:[#allocation2 + $0xda8] sm:$0xff]
    %v463 = vld [vmem:[#allocation2 + $0xdb0] sm:$0xff]
    %v464 = vld [vmem:[#allocation2 + $0xdb8] sm:$0xff]
    %v465 = vld [vmem:[#allocation2 + $0xdc0] sm:$0xff]
    %v466 = vld [vmem:[#allocation2 + $0xdc8] sm:$0xff]
    %v467 = vld [vmem:[#allocation2 + $0xdd0] sm:$0xff]
    %v468 = vld [vmem:[#allocation2 + $0xdd8] sm:$0xff]
    %v469 = vld [vmem:[#allocation2 + $0xde0] sm:$0xff]
    %v470 = vld [vmem:[#allocation2 + $0xde8] sm:$0xff]
    %v471 = vld [vmem:[#allocation2 + $0xdf0] sm:$0xff]
    %v472 = vld [vmem:[#allocation2 + $0xdf8] sm:$0xff]
    %v473 = vld [vmem:[#allocation2 + $0xe00] sm:$0xff]
    %v474 = vld [vmem:[#allocation2 + $0xe08] sm:$0xff]
    %v475 = vld [vmem:[#allocation2 + $0xe10] sm:$0xff]
    %v476 = vld [vmem:[#allocation2 + $0xe18] sm:$0xff]
    %v477 = vld [vmem:[#allocation2 + $0xe20] sm:$0xff]
    %v478 = vld [vmem:[#allocation2 + $0xe28] sm:$0xff]
    %v479 = vld [vmem:[#allocation2 + $0xe30] sm:$0xff]
    %v480 = vld [vmem:[#allocation2 + $0xe38] sm:$0xff]
    %v481 = vld [vmem:[#allocation2 + $0xe40] sm:$0xff]
    %v482 = vld [vmem:[#allocation2 + $0xe48] sm:$0xff]
    %v483 = vld [vmem:[#allocation2 + $0xe50] sm:$0xff]
    %v484 = vld [vmem:[#allocation2 + $0xe58] sm:$0xff]
    %v485 = vld [vmem:[#allocation2 + $0xe60] sm:$0xff]
    %v486 = vld [vmem:[#allocation2 + $0xe68] sm:$0xff]
    %v487 = vld [vmem:[#allocation2 + $0xe70] sm:$0xff]
    %v488 = vld [vmem:[#allocation2 + $0xe78] sm:$0xff]
    %v489 = vld [vmem:[#allocation2 + $0xe80] sm:$0xff]
    %v490 = vld [vmem:[#allocation2 + $0xe88] sm:$0xff]
    %v491 = vld [vmem:[#allocation2 + $0xe90] sm:$0xff]
    %v492 = vld [vmem:[#allocation2 + $0xe98] sm:$0xff]
    %v493 = vld [vmem:[#allocation2 + $0xea0] sm:$0xff]
    %v494 = vld [vmem:[#allocation2 + $0xea8] sm:$0xff]
    %v495 = vld [vmem:[#allocation2 + $0xeb0] sm:$0xff]
    %v496 = vld [vmem:[#allocation2 + $0xeb8] sm:$0xff]
    %v497 = vld [vmem:[#allocation2 + $0xec0] sm:$0xff]
    %v498 = vld [vmem:[#allocation2 + $0xec8] sm:$0xff]
    %v499 = vld [vmem:[#allocation2 + $0xed0] sm:$0xff]
    %v500 = vld [vmem:[#allocation2 + $0xed8] sm:$0xff]
    %v501 = vld [vmem:[#allocation2 + $0xee0] sm:$0xff]
    %v502 = vld [vmem:[#allocation2 + $0xee8] sm:$0xff]
    %v503 = vld [vmem:[#allocation2 + $0xef0] sm:$0xff]
    %v504 = vld [vmem:[#allocation2 + $0xef8] sm:$0xff]
    %v505 = vld [vmem:[#allocation2 + $0xf00] sm:$0xff]
    %v506 = vld [vmem:[#allocation2 + $0xf08] sm:$0xff]
    %v507 = vld [vmem:[#allocation2 + $0xf10] sm:$0xff]
    %v508 = vld [vmem:[#allocation2 + $0xf18] sm:$0xff]
    %v509 = vld [vmem:[#allocation2 + $0xf20] sm:$0xff]
    %v510 = vld [vmem:[#allocation2 + $0xf28] sm:$0xff]
    %v511 = vld [vmem:[#allocation2 + $0xf30] sm:$0xff]
    %v512 = vld [vmem:[#allocation2 + $0xf38] sm:$0xff]
    %v513 = vld [vmem:[#allocation2 + $0xf40] sm:$0xff]
    %v514 = vld [vmem:[#allocation2 + $0xf48] sm:$0xff]
    %v515 = vld [vmem:[#allocation2 + $0xf50] sm:$0xff]
    %v516 = vld [vmem:[#allocation2 + $0xf58] sm:$0xff]
    %v517 = vld [vmem:[#allocation2 + $0xf60] sm:$0xff]
    %v518 = vld [vmem:[#allocation2 + $0xf68] sm:$0xff]
    %v519 = vld [vmem:[#allocation2 + $0xf70] sm:$0xff]
    %v520 = vld [vmem:[#allocation2 + $0xf78] sm:$0xff]
    %v521 = vld [vmem:[#allocation2 + $0xf80] sm:$0xff]
    %v522 = vld [vmem:[#allocation2 + $0xf88] sm:$0xff]
    %v523 = vld [vmem:[#allocation2 + $0xf90] sm:$0xff]
    %v524 = vld [vmem:[#allocation2 + $0xf98] sm:$0xff]
    %v525 = vld [vmem:[#allocation2 + $0xfa0] sm:$0xff]
    %v526 = vld [vmem:[#allocation2 + $0xfa8] sm:$0xff]
    %v527 = vld [vmem:[#allocation2 + $0xfb0] sm:$0xff]
    %v528 = vld [vmem:[#allocation2 + $0xfb8] sm:$0xff]
    %v529 = vld [vmem:[#allocation2 + $0xfc0] sm:$0xff]
    %v530 = vld [vmem:[#allocation2 + $0xfc8] sm:$0xff]
    %v531 = vld [vmem:[#allocation2 + $0xfd0] sm:$0xff]
    %v532 = vld [vmem:[#allocation2 + $0xfd8] sm:$0xff]
    %v533 = vld [vmem:[#allocation2 + $0xfe0] sm:$0xff]
    %v534 = vld [vmem:[#allocation2 + $0xfe8] sm:$0xff]
    %v535 = vld [vmem:[#allocation2 + $0xff0] sm:$0xff]
    %v536 = vld [vmem:[#allocation2 + $0xff8] sm:$0xff]
    %v537 = vld [vmem:[%s1] sm:$0xff]
    %v538 = vld [vmem:[%s1 + $0x8] sm:$0xff]
    %v539 = vld [vmem:[%s1 + $0x10] sm:$0xff]
    %v540 = vld [vmem:[%s1 + $0x18] sm:$0xff]
    %v541 = vld [vmem:[%s1 + $0x20] sm:$0xff]
    %v542 = vld [vmem:[%s1 + $0x28] sm:$0xff]
    %v543 = vld [vmem:[%s1 + $0x30] sm:$0xff]
    %v544 = vld [vmem:[%s1 + $0x38] sm:$0xff]
    %v545 = vld [vmem:[%s1 + $0x40] sm:$0xff]
    %v546 = vld [vmem:[%s1 + $0x48] sm:$0xff]
    %v547 = vld [vmem:[%s1 + $0x50] sm:$0xff]
    %v548 = vld [vmem:[%s1 + $0x58] sm:$0xff]
    %v549 = vld [vmem:[%s1 + $0x60] sm:$0xff]
    %v550 = vld [vmem:[%s1 + $0x68] sm:$0xff]
    %v551 = vld [vmem:[%s1 + $0x70] sm:$0xff]
    %v552 = vld [vmem:[%s1 + $0x78] sm:$0xff]
    %v553 = vld [vmem:[%s1 + $0x80] sm:$0xff]
    %v554 = vld [vmem:[%s1 + $0x88] sm:$0xff]
    %v555 = vld [vmem:[%s1 + $0x90] sm:$0xff]
    %v556 = vld [vmem:[%s1 + $0x98] sm:$0xff]
    %v557 = vld [vmem:[%s1 + $0xa0] sm:$0xff]
    %v558 = vld [vmem:[%s1 + $0xa8] sm:$0xff]
    %v559 = vld [vmem:[%s1 + $0xb0] sm:$0xff]
    %v560 = vld [vmem:[%s1 + $0xb8] sm:$0xff]
    %v561 = vld [vmem:[%s1 + $0xc0] sm:$0xff]
    %v562 = vld [vmem:[%s1 + $0xc8] sm:$0xff]
    %v563 = vld [vmem:[%s1 + $0xd0] sm:$0xff]
    %v564 = vld [vmem:[%s1 + $0xd8] sm:$0xff]
    %v565 = vld [vmem:[%s1 + $0xe0] sm:$0xff]
    %v566 = vld [vmem:[%s1 + $0xe8] sm:$0xff]
    %v567 = vld [vmem:[%s1 + $0xf0] sm:$0xff]
    %v568 = vld [vmem:[%s1 + $0xf8] sm:$0xff]
    %v569 = vld [vmem:[%s1 + $0x100] sm:$0xff]
    %v570 = vld [vmem:[%s1 + $0x108] sm:$0xff]
    %v571 = vld [vmem:[%s1 + $0x110] sm:$0xff]
    %v572 = vld [vmem:[%s1 + $0x118] sm:$0xff]
    %v573 = vld [vmem:[%s1 + $0x120] sm:$0xff]
    %v574 = vld [vmem:[%s1 + $0x128] sm:$0xff]
    %v575 = vld [vmem:[%s1 + $0x130] sm:$0xff]
    %v576 = vld [vmem:[%s1 + $0x138] sm:$0xff]
    %v577 = vld [vmem:[%s1 + $0x140] sm:$0xff]
    %v578 = vld [vmem:[%s1 + $0x148] sm:$0xff]
    %v579 = vld [vmem:[%s1 + $0x150] sm:$0xff]
    %v580 = vld [vmem:[%s1 + $0x158] sm:$0xff]
    %v581 = vld [vmem:[%s1 + $0x160] sm:$0xff]
    %v582 = vld [vmem:[%s1 + $0x168] sm:$0xff]
    %v583 = vld [vmem:[%s1 + $0x170] sm:$0xff]
    %v584 = vld [vmem:[%s1 + $0x178] sm:$0xff]
    %v585 = vld [vmem:[%s1 + $0x180] sm:$0xff]
    %v586 = vld [vmem:[%s1 + $0x188] sm:$0xff]
    %v587 = vld [vmem:[%s1 + $0x190] sm:$0xff]
    %v588 = vld [vmem:[%s1 + $0x198] sm:$0xff]
    %v589 = vld [vmem:[%s1 + $0x1a0] sm:$0xff]
    %v590 = vld [vmem:[%s1 + $0x1a8] sm:$0xff]
    %v591 = vld [vmem:[%s1 + $0x1b0] sm:$0xff]
    %v592 = vld [vmem:[%s1 + $0x1b8] sm:$0xff]
    %v593 = vld [vmem:[%s1 + $0x1c0] sm:$0xff]
    %v594 = vld [vmem:[%s1 + $0x1c8] sm:$0xff]
    %v595 = vld [vmem:[%s1 + $0x1d0] sm:$0xff]
    %v596 = vld [vmem:[%s1 + $0x1d8] sm:$0xff]
    %v597 = vld [vmem:[%s1 + $0x1e0] sm:$0xff]
    %v598 = vld [vmem:[%s1 + $0x1e8] sm:$0xff]
    %v599 = vld [vmem:[%s1 + $0x1f0] sm:$0xff]
    %v600 = vld [vmem:[%s1 + $0x1f8] sm:$0xff]
    %v601 = vld [vmem:[%s1 + $0x200] sm:$0xff]
    %v602 = vld [vmem:[%s1 + $0x208] sm:$0xff]
    %v603 = vld [vmem:[%s1 + $0x210] sm:$0xff]
    %v604 = vld [vmem:[%s1 + $0x218] sm:$0xff]
    %v605 = vld [vmem:[%s1 + $0x220] sm:$0xff]
    %v606 = vld [vmem:[%s1 + $0x228] sm:$0xff]
    %v607 = vld [vmem:[%s1 + $0x230] sm:$0xff]
    %v608 = vld [vmem:[%s1 + $0x238] sm:$0xff]
    %v609 = vld [vmem:[%s1 + $0x240] sm:$0xff]
    %v610 = vld [vmem:[%s1 + $0x248] sm:$0xff]
    %v611 = vld [vmem:[%s1 + $0x250] sm:$0xff]
    %v612 = vld [vmem:[%s1 + $0x258] sm:$0xff]
    %v613 = vld [vmem:[%s1 + $0x260] sm:$0xff]
    %v614 = vld [vmem:[%s1 + $0x268] sm:$0xff]
    %v615 = vld [vmem:[%s1 + $0x270] sm:$0xff]
    %v616 = vld [vmem:[%s1 + $0x278] sm:$0xff]
    %v617 = vld [vmem:[%s1 + $0x280] sm:$0xff]
    %v618 = vld [vmem:[%s1 + $0x288] sm:$0xff]
    %v619 = vld [vmem:[%s1 + $0x290] sm:$0xff]
    %v620 = vld [vmem:[%s1 + $0x298] sm:$0xff]
    %v621 = vld [vmem:[%s1 + $0x2a0] sm:$0xff]
    %v622 = vld [vmem:[%s1 + $0x2a8] sm:$0xff]
    %v623 = vld [vmem:[%s1 + $0x2b0] sm:$0xff]
    %v624 = vld [vmem:[%s1 + $0x2b8] sm:$0xff]
    %v625 = vld [vmem:[%s1 + $0x2c0] sm:$0xff]
    %v626 = vld [vmem:[%s1 + $0x2c8] sm:$0xff]
    %v627 = vld [vmem:[%s1 + $0x2d0] sm:$0xff]
    %v628 = vld [vmem:[%s1 + $0x2d8] sm:$0xff]
    %v629 = vld [vmem:[%s1 + $0x2e0] sm:$0xff]
    %v630 = vld [vmem:[%s1 + $0x2e8] sm:$0xff]
    %v631 = vld [vmem:[%s1 + $0x2f0] sm:$0xff]
    %v632 = vld [vmem:[%s1 + $0x2f8] sm:$0xff]
    %v633 = vld [vmem:[%s1 + $0x300] sm:$0xff]
    %v634 = vld [vmem:[%s1 + $0x308] sm:$0xff]
    %v635 = vld [vmem:[%s1 + $0x310] sm:$0xff]
    %v636 = vld [vmem:[%s1 + $0x318] sm:$0xff]
    %v637 = vld [vmem:[%s1 + $0x320] sm:$0xff]
    %v638 = vld [vmem:[%s1 + $0x328] sm:$0xff]
    %v639 = vld [vmem:[%s1 + $0x330] sm:$0xff]
    %v640 = vld [vmem:[%s1 + $0x338] sm:$0xff]
    %v641 = vld [vmem:[%s1 + $0x340] sm:$0xff]
    %v642 = vld [vmem:[%s1 + $0x348] sm:$0xff]
    %v643 = vld [vmem:[%s1 + $0x350] sm:$0xff]
    %v644 = vld [vmem:[%s1 + $0x358] sm:$0xff]
    %v645 = vld [vmem:[%s1 + $0x360] sm:$0xff]
    %v646 = vld [vmem:[%s1 + $0x368] sm:$0xff]
    %v647 = vld [vmem:[%s1 + $0x370] sm:$0xff]
    %v648 = vld [vmem:[%s1 + $0x378] sm:$0xff]
    %v649 = vld [vmem:[%s1 + $0x380] sm:$0xff]
    %v650 = vld [vmem:[%s1 + $0x388] sm:$0xff]
    %v651 = vld [vmem:[%s1 + $0x390] sm:$0xff]
    %v652 = vld [vmem:[%s1 + $0x398] sm:$0xff]
    %v653 = vld [vmem:[%s1 + $0x3a0] sm:$0xff]
    %v654 = vld [vmem:[%s1 + $0x3a8] sm:$0xff]
    %v655 = vld [vmem:[%s1 + $0x3b0] sm:$0xff]
    %v656 = vld [vmem:[%s1 + $0x3b8] sm:$0xff]
    %v657 = vld [vmem:[%s1 + $0x3c0] sm:$0xff]
    %v658 = vld [vmem:[%s1 + $0x3c8] sm:$0xff]
    %v659 = vld [vmem:[%s1 + $0x3d0] sm:$0xff]
    %v660 = vld [vmem:[%s1 + $0x3d8] sm:$0xff]
    %v661 = vld [vmem:[%s1 + $0x3e0] sm:$0xff]
    %v662 = vld [vmem:[%s1 + $0x3e8] sm:$0xff]
    %v663 = vld [vmem:[%s1 + $0x3f0] sm:$0xff]
    %v664 = vld [vmem:[%s1 + $0x3f8] sm:$0xff]
    %665 = vmatprep.subr.mxu0 %v568
    %666 = vmatpush1.msra.mxu0 %v567
    %667 = vmatprep.subr.mxu0 %v566
    %668 = vmatpush1.msra.mxu0 %v565
    %669 = vmatprep.subr.mxu0 %v564
    %670 = vmatpush1.msra.mxu0 %v563
    %671 = vmatprep.subr.mxu0 %v562
    %672 = vmatpush1.msra.mxu0 %v561
    %673 = vmatprep.subr.mxu0 %v560
    %674 = vmatpush1.msra.mxu0 %v559
    %675 = vmatprep.subr.mxu0 %v558
    %676 = vmatpush1.msra.mxu0 %v557
    %677 = vmatprep.subr.mxu0 %v556
    %678 = vmatpush1.msra.mxu0 %v555
    %679 = vmatprep.subr.mxu0 %v554
    %680 = vmatpush1.msra.mxu0 %v553
    %681 = vmatprep.subr.mxu0 %v552
    %682 = vmatpush1.msra.mxu0 %v551
    %683 = vmatprep.subr.mxu0 %v550
    %684 = vmatpush1.msra.mxu0 %v549
    %685 = vmatprep.subr.mxu0 %v548
    %686 = vmatpush1.msra.mxu0 %v547
    %687 = vmatprep.subr.mxu0 %v546
    %688 = vmatpush1.msra.mxu0 %v545
    %689 = vmatprep.subr.mxu0 %v544
    %690 = vmatpush1.msra.mxu0 %v543
    %691 = vmatprep.subr.mxu0 %v542
    %692 = vmatpush1.msra.mxu0 %v541
    %693 = vmatprep.subr.mxu0 %v540
    %694 = vmatpush1.msra.mxu0 %v539
    %695 = vmatprep.subr.mxu0 %v538
    %696 = vmatpush1.msra.mxu0 %v537
    %697 = vmatprep.subr.mxu0 %v600
    %698 = vmatpush2.msra.mxu0 %v599
    %699 = vmatprep.subr.mxu0 %v598
    %700 = vmatpush2.msra.mxu0 %v597
    %701 = vmatprep.subr.mxu0 %v596
    %702 = vmatpush2.msra.mxu0 %v595
    %703 = vmatprep.subr.mxu0 %v594
    %704 = vmatpush2.msra.mxu0 %v593
    %705 = vmatprep.subr.mxu0 %v592
    %706 = vmatpush2.msra.mxu0 %v591
    %707 = vmatprep.subr.mxu0 %v590
    %708 = vmatpush2.msra.mxu0 %v589
    %709 = vmatprep.subr.mxu0 %v588
    %710 = vmatpush2.msra.mxu0 %v587
    %711 = vmatprep.subr.mxu0 %v586
    %712 = vmatpush2.msra.mxu0 %v585
    %713 = vmatprep.subr.mxu0 %v584
    %714 = vmatpush2.msra.mxu0 %v583
    %715 = vmatprep.subr.mxu0 %v582
    %716 = vmatpush2.msra.mxu0 %v581
    %717 = vmatprep.subr.mxu0 %v580
    %718 = vmatpush2.msra.mxu0 %v579
    %719 = vmatprep.subr.mxu0 %v578
    %720 = vmatpush2.msra.mxu0 %v577
    %721 = vmatprep.subr.mxu0 %v576
    %722 = vmatpush2.msra.mxu0 %v575
    %723 = vmatprep.subr.mxu0 %v574
    %724 = vmatpush2.msra.mxu0 %v573
    %725 = vmatprep.subr.mxu0 %v572
    %726 = vmatpush2.msra.mxu0 %v571
    %727 = vmatprep.subr.mxu0 %v570
    %728 = vmatpush2.msra.mxu0 %v569
    %729 = vmatprep.mubr.f32.mxu0 %v26
    %730 = vmatmul.mubr.f32.gmra.mxu0 %v25
    %v731 = vpop.f32.mrf.mxu0
    %v732 = vadd.f32 0.0, %v731
    %v733 = vpop.f32.mrf.mxu0
    %v734 = vadd.f32 0.0, %v733
    %735 = vmatprep.mubr.f32.mxu0 %v30
    %736 = vmatmul.mubr.f32.gmra.mxu0 %v29
    %v737 = vpop.f32.mrf.mxu0
    %v738 = vadd.f32 0.0, %v737
    %v739 = vpop.f32.mrf.mxu0
    %v740 = vadd.f32 0.0, %v739
    %741 = vmatprep.mubr.f32.mxu0 %v34
    %742 = vmatmul.mubr.f32.gmra.mxu0 %v33
    %v743 = vpop.f32.mrf.mxu0
    %v744 = vadd.f32 0.0, %v743
    %v745 = vpop.f32.mrf.mxu0
    %v746 = vadd.f32 0.0, %v745
    %747 = vmatprep.mubr.f32.mxu0 %v38
    %748 = vmatmul.mubr.f32.gmra.mxu0 %v37
    %v749 = vpop.f32.mrf.mxu0
    %v750 = vadd.f32 0.0, %v749
    %v751 = vpop.f32.mrf.mxu0
    %v752 = vadd.f32 0.0, %v751
    %753 = vmatprep.mubr.f32.mxu0 %v42
    %754 = vmatmul.mubr.f32.gmra.mxu0 %v41
    %v755 = vpop.f32.mrf.mxu0
    %v756 = vadd.f32 0.0, %v755
    %v757 = vpop.f32.mrf.mxu0
    %v758 = vadd.f32 0.0, %v757
    %759 = vmatprep.mubr.f32.mxu0 %v46
    %760 = vmatmul.mubr.f32.gmra.mxu0 %v45
    %v761 = vpop.f32.mrf.mxu0
    %v762 = vadd.f32 0.0, %v761
    %v763 = vpop.f32.mrf.mxu0
    %v764 = vadd.f32 0.0, %v763
    %765 = vmatprep.mubr.f32.mxu0 %v50
    %766 = vmatmul.mubr.f32.gmra.mxu0 %v49
    %v767 = vpop.f32.mrf.mxu0
    %v768 = vadd.f32 0.0, %v767
    %v769 = vpop.f32.mrf.mxu0
    %v770 = vadd.f32 0.0, %v769
    %771 = vmatprep.mubr.f32.mxu0 %v54
    %772 = vmatmul.mubr.f32.gmra.mxu0 %v53
    %v773 = vpop.f32.mrf.mxu0
    %v774 = vadd.f32 0.0, %v773
    %v775 = vpop.f32.mrf.mxu0
    %v776 = vadd.f32 0.0, %v775
    %777 = vmatprep.mubr.f32.mxu0 %v58
    %778 = vmatmul.mubr.f32.gmra.mxu0 %v57
    %v779 = vpop.f32.mrf.mxu0
    %v780 = vadd.f32 0.0, %v779
    %v781 = vpop.f32.mrf.mxu0
    %v782 = vadd.f32 0.0, %v781
    %783 = vmatprep.mubr.f32.mxu0 %v62
    %784 = vmatmul.mubr.f32.gmra.mxu0 %v61
    %v785 = vpop.f32.mrf.mxu0
    %v786 = vadd.f32 0.0, %v785
    %v787 = vpop.f32.mrf.mxu0
    %v788 = vadd.f32 0.0, %v787
    %789 = vmatprep.mubr.f32.mxu0 %v66
    %790 = vmatmul.mubr.f32.gmra.mxu0 %v65
    %v791 = vpop.f32.mrf.mxu0
    %v792 = vadd.f32 0.0, %v791
    %v793 = vpop.f32.mrf.mxu0
    %v794 = vadd.f32 0.0, %v793
    %795 = vmatprep.mubr.f32.mxu0 %v70
    %796 = vmatmul.mubr.f32.gmra.mxu0 %v69
    %v797 = vpop.f32.mrf.mxu0
    %v798 = vadd.f32 0.0, %v797
    %v799 = vpop.f32.mrf.mxu0
    %v800 = vadd.f32 0.0, %v799
    %801 = vmatprep.mubr.f32.mxu0 %v74
    %802 = vmatmul.mubr.f32.gmra.mxu0 %v73
    %v803 = vpop.f32.mrf.mxu0
    %v804 = vadd.f32 0.0, %v803
    %v805 = vpop.f32.mrf.mxu0
    %v806 = vadd.f32 0.0, %v805
    %807 = vmatprep.mubr.f32.mxu0 %v78
    %808 = vmatmul.mubr.f32.gmra.mxu0 %v77
    %v809 = vpop.f32.mrf.mxu0
    %v810 = vadd.f32 0.0, %v809
    %v811 = vpop.f32.mrf.mxu0
    %v812 = vadd.f32 0.0, %v811
    %813 = vmatprep.mubr.f32.mxu0 %v82
    %814 = vmatmul.mubr.f32.gmra.mxu0 %v81
    %v815 = vpop.f32.mrf.mxu0
    %v816 = vadd.f32 0.0, %v815
    %v817 = vpop.f32.mrf.mxu0
    %v818 = vadd.f32 0.0, %v817
    %819 = vmatprep.mubr.f32.mxu0 %v86
    %820 = vmatmul.mubr.f32.gmra.mxu0 %v85
    %v821 = vpop.f32.mrf.mxu0
    %v822 = vadd.f32 0.0, %v821
    %v823 = vpop.f32.mrf.mxu0
    %v824 = vadd.f32 0.0, %v823
    %825 = vmatprep.mubr.f32.mxu0 %v90
    %826 = vmatmul.mubr.f32.gmra.mxu0 %v89
    %v827 = vpop.f32.mrf.mxu0
    %v828 = vadd.f32 0.0, %v827
    %v829 = vpop.f32.mrf.mxu0
    %v830 = vadd.f32 0.0, %v829
    %831 = vmatprep.mubr.f32.mxu0 %v94
    %832 = vmatmul.mubr.f32.gmra.mxu0 %v93
    %v833 = vpop.f32.mrf.mxu0
    %v834 = vadd.f32 0.0, %v833
    %v835 = vpop.f32.mrf.mxu0
    %v836 = vadd.f32 0.0, %v835
    %837 = vmatprep.mubr.f32.mxu0 %v98
    %838 = vmatmul.mubr.f32.gmra.mxu0 %v97
    %v839 = vpop.f32.mrf.mxu0
    %v840 = vadd.f32 0.0, %v839
    %v841 = vpop.f32.mrf.mxu0
    %v842 = vadd.f32 0.0, %v841
    %843 = vmatprep.mubr.f32.mxu0 %v102
    %844 = vmatmul.mubr.f32.gmra.mxu0 %v101
    %v845 = vpop.f32.mrf.mxu0
    %v846 = vadd.f32 0.0, %v845
    %v847 = vpop.f32.mrf.mxu0
    %v848 = vadd.f32 0.0, %v847
    %849 = vmatprep.mubr.f32.mxu0 %v106
    %850 = vmatmul.mubr.f32.gmra.mxu0 %v105
    %v851 = vpop.f32.mrf.mxu0
    %v852 = vadd.f32 0.0, %v851
    %v853 = vpop.f32.mrf.mxu0
    %v854 = vadd.f32 0.0, %v853
    %855 = vmatprep.mubr.f32.mxu0 %v110
    %856 = vmatmul.mubr.f32.gmra.mxu0 %v109
    %v857 = vpop.f32.mrf.mxu0
    %v858 = vadd.f32 0.0, %v857
    %v859 = vpop.f32.mrf.mxu0
    %v860 = vadd.f32 0.0, %v859
    %861 = vmatprep.mubr.f32.mxu0 %v114
    %862 = vmatmul.mubr.f32.gmra.mxu0 %v113
    %v863 = vpop.f32.mrf.mxu0
    %v864 = vadd.f32 0.0, %v863
    %v865 = vpop.f32.mrf.mxu0
    %v866 = vadd.f32 0.0, %v865
    %867 = vmatprep.mubr.f32.mxu0 %v118
    %868 = vmatmul.mubr.f32.gmra.mxu0 %v117
    %v869 = vpop.f32.mrf.mxu0
    %v870 = vadd.f32 0.0, %v869
    %v871 = vpop.f32.mrf.mxu0
    %v872 = vadd.f32 0.0, %v871
    %873 = vmatprep.mubr.f32.mxu0 %v122
    %874 = vmatmul.mubr.f32.gmra.mxu0 %v121
    %v875 = vpop.f32.mrf.mxu0
    %v876 = vadd.f32 0.0, %v875
    %v877 = vpop.f32.mrf.mxu0
    %v878 = vadd.f32 0.0, %v877
    %879 = vmatprep.mubr.f32.mxu0 %v126
    %880 = vmatmul.mubr.f32.gmra.mxu0 %v125
    %v881 = vpop.f32.mrf.mxu0
    %v882 = vadd.f32 0.0, %v881
    %v883 = vpop.f32.mrf.mxu0
    %v884 = vadd.f32 0.0, %v883
    %885 = vmatprep.mubr.f32.mxu0 %v130
    %886 = vmatmul.mubr.f32.gmra.mxu0 %v129
    %v887 = vpop.f32.mrf.mxu0
    %v888 = vadd.f32 0.0, %v887
    %v889 = vpop.f32.mrf.mxu0
    %v890 = vadd.f32 0.0, %v889
    %891 = vmatprep.mubr.f32.mxu0 %v134
    %892 = vmatmul.mubr.f32.gmra.mxu0 %v133
    %v893 = vpop.f32.mrf.mxu0
    %v894 = vadd.f32 0.0, %v893
    %v895 = vpop.f32.mrf.mxu0
    %v896 = vadd.f32 0.0, %v895
    %897 = vmatprep.mubr.f32.mxu0 %v138
    %898 = vmatmul.mubr.f32.gmra.mxu0 %v137
    %v899 = vpop.f32.mrf.mxu0
    %v900 = vadd.f32 0.0, %v899
    %v901 = vpop.f32.mrf.mxu0
    %v902 = vadd.f32 0.0, %v901
    %903 = vmatprep.mubr.f32.mxu0 %v142
    %904 = vmatmul.mubr.f32.gmra.mxu0 %v141
    %v905 = vpop.f32.mrf.mxu0
    %v906 = vadd.f32 0.0, %v905
    %v907 = vpop.f32.mrf.mxu0
    %v908 = vadd.f32 0.0, %v907
    %909 = vmatprep.mubr.f32.mxu0 %v146
    %910 = vmatmul.mubr.f32.gmra.mxu0 %v145
    %v911 = vpop.f32.mrf.mxu0
    %v912 = vadd.f32 0.0, %v911
    %v913 = vpop.f32.mrf.mxu0
    %v914 = vadd.f32 0.0, %v913
    %915 = vmatprep.mubr.f32.mxu0 %v150
    %916 = vmatmul.mubr.f32.gmra.mxu0 %v149
    %v917 = vpop.f32.mrf.mxu0
    %v918 = vadd.f32 0.0, %v917
    %v919 = vpop.f32.mrf.mxu0
    %v920 = vadd.f32 0.0, %v919
    %921 = vmatprep.mubr.f32.mxu0 %v154
    %922 = vmatmul.mubr.f32.gmra.mxu0 %v153
    %v923 = vpop.f32.mrf.mxu0
    %v924 = vadd.f32 0.0, %v923
    %v925 = vpop.f32.mrf.mxu0
    %v926 = vadd.f32 0.0, %v925
    %927 = vmatprep.mubr.f32.mxu0 %v158
    %928 = vmatmul.mubr.f32.gmra.mxu0 %v157
    %v929 = vpop.f32.mrf.mxu0
    %v930 = vadd.f32 0.0, %v929
    %v931 = vpop.f32.mrf.mxu0
    %v932 = vadd.f32 0.0, %v931
    %933 = vmatprep.mubr.f32.mxu0 %v162
    %934 = vmatmul.mubr.f32.gmra.mxu0 %v161
    %v935 = vpop.f32.mrf.mxu0
    %v936 = vadd.f32 0.0, %v935
    %v937 = vpop.f32.mrf.mxu0
    %v938 = vadd.f32 0.0, %v937
    %939 = vmatprep.mubr.f32.mxu0 %v166
    %940 = vmatmul.mubr.f32.gmra.mxu0 %v165
    %v941 = vpop.f32.mrf.mxu0
    %v942 = vadd.f32 0.0, %v941
    %v943 = vpop.f32.mrf.mxu0
    %v944 = vadd.f32 0.0, %v943
    %945 = vmatprep.mubr.f32.mxu0 %v170
    %946 = vmatmul.mubr.f32.gmra.mxu0 %v169
    %v947 = vpop.f32.mrf.mxu0
    %v948 = vadd.f32 0.0, %v947
    %v949 = vpop.f32.mrf.mxu0
    %v950 = vadd.f32 0.0, %v949
    %951 = vmatprep.mubr.f32.mxu0 %v174
    %952 = vmatmul.mubr.f32.gmra.mxu0 %v173
    %v953 = vpop.f32.mrf.mxu0
    %v954 = vadd.f32 0.0, %v953
    %v955 = vpop.f32.mrf.mxu0
    %v956 = vadd.f32 0.0, %v955
    %957 = vmatprep.mubr.f32.mxu0 %v178
    %958 = vmatmul.mubr.f32.gmra.mxu0 %v177
    %v959 = vpop.f32.mrf.mxu0
    %v960 = vadd.f32 0.0, %v959
    %v961 = vpop.f32.mrf.mxu0
    %v962 = vadd.f32 0.0, %v961
    %963 = vmatprep.mubr.f32.mxu0 %v182
    %964 = vmatmul.mubr.f32.gmra.mxu0 %v181
    %v965 = vpop.f32.mrf.mxu0
    %v966 = vadd.f32 0.0, %v965
    %v967 = vpop.f32.mrf.mxu0
    %v968 = vadd.f32 0.0, %v967
    %969 = vmatprep.mubr.f32.mxu0 %v186
    %970 = vmatmul.mubr.f32.gmra.mxu0 %v185
    %v971 = vpop.f32.mrf.mxu0
    %v972 = vadd.f32 0.0, %v971
    %v973 = vpop.f32.mrf.mxu0
    %v974 = vadd.f32 0.0, %v973
    %975 = vmatprep.mubr.f32.mxu0 %v190
    %976 = vmatmul.mubr.f32.gmra.mxu0 %v189
    %v977 = vpop.f32.mrf.mxu0
    %v978 = vadd.f32 0.0, %v977
    %v979 = vpop.f32.mrf.mxu0
    %v980 = vadd.f32 0.0, %v979
    %981 = vmatprep.mubr.f32.mxu0 %v194
    %982 = vmatmul.mubr.f32.gmra.mxu0 %v193
    %v983 = vpop.f32.mrf.mxu0
    %v984 = vadd.f32 0.0, %v983
    %v985 = vpop.f32.mrf.mxu0
    %v986 = vadd.f32 0.0, %v985
    %987 = vmatprep.mubr.f32.mxu0 %v198
    %988 = vmatmul.mubr.f32.gmra.mxu0 %v197
    %v989 = vpop.f32.mrf.mxu0
    %v990 = vadd.f32 0.0, %v989
    %v991 = vpop.f32.mrf.mxu0
    %v992 = vadd.f32 0.0, %v991
    %993 = vmatprep.mubr.f32.mxu0 %v202
    %994 = vmatmul.mubr.f32.gmra.mxu0 %v201
    %v995 = vpop.f32.mrf.mxu0
    %v996 = vadd.f32 0.0, %v995
    %v997 = vpop.f32.mrf.mxu0
    %v998 = vadd.f32 0.0, %v997
    %999 = vmatprep.mubr.f32.mxu0 %v206
    %1000 = vmatmul.mubr.f32.gmra.mxu0 %v205
    %v1001 = vpop.f32.mrf.mxu0
    %v1002 = vadd.f32 0.0, %v1001
    %v1003 = vpop.f32.mrf.mxu0
    %v1004 = vadd.f32 0.0, %v1003
    %1005 = vmatprep.mubr.f32.mxu0 %v210
    %1006 = vmatmul.mubr.f32.gmra.mxu0 %v209
    %v1007 = vpop.f32.mrf.mxu0
    %v1008 = vadd.f32 0.0, %v1007
    %v1009 = vpop.f32.mrf.mxu0
    %v1010 = vadd.f32 0.0, %v1009
    %1011 = vmatprep.mubr.f32.mxu0 %v214
    %1012 = vmatmul.mubr.f32.gmra.mxu0 %v213
    %v1013 = vpop.f32.mrf.mxu0
    %v1014 = vadd.f32 0.0, %v1013
    %v1015 = vpop.f32.mrf.mxu0
    %v1016 = vadd.f32 0.0, %v1015
    %1017 = vmatprep.mubr.f32.mxu0 %v218
    %1018 = vmatmul.mubr.f32.gmra.mxu0 %v217
    %v1019 = vpop.f32.mrf.mxu0
    %v1020 = vadd.f32 0.0, %v1019
    %v1021 = vpop.f32.mrf.mxu0
    %v1022 = vadd.f32 0.0, %v1021
    %1023 = vmatprep.mubr.f32.mxu0 %v222
    %1024 = vmatmul.mubr.f32.gmra.mxu0 %v221
    %v1025 = vpop.f32.mrf.mxu0
    %v1026 = vadd.f32 0.0, %v1025
    %v1027 = vpop.f32.mrf.mxu0
    %v1028 = vadd.f32 0.0, %v1027
    %1029 = vmatprep.mubr.f32.mxu0 %v226
    %1030 = vmatmul.mubr.f32.gmra.mxu0 %v225
    %v1031 = vpop.f32.mrf.mxu0
    %v1032 = vadd.f32 0.0, %v1031
    %v1033 = vpop.f32.mrf.mxu0
    %v1034 = vadd.f32 0.0, %v1033
    %1035 = vmatprep.mubr.f32.mxu0 %v230
    %1036 = vmatmul.mubr.f32.gmra.mxu0 %v229
    %v1037 = vpop.f32.mrf.mxu0
    %v1038 = vadd.f32 0.0, %v1037
    %v1039 = vpop.f32.mrf.mxu0
    %v1040 = vadd.f32 0.0, %v1039
    %1041 = vmatprep.mubr.f32.mxu0 %v234
    %1042 = vmatmul.mubr.f32.gmra.mxu0 %v233
    %v1043 = vpop.f32.mrf.mxu0
    %v1044 = vadd.f32 0.0, %v1043
    %v1045 = vpop.f32.mrf.mxu0
    %v1046 = vadd.f32 0.0, %v1045
    %1047 = vmatprep.mubr.f32.mxu0 %v238
    %1048 = vmatmul.mubr.f32.gmra.mxu0 %v237
    %v1049 = vpop.f32.mrf.mxu0
    %v1050 = vadd.f32 0.0, %v1049
    %v1051 = vpop.f32.mrf.mxu0
    %v1052 = vadd.f32 0.0, %v1051
    %1053 = vmatprep.mubr.f32.mxu0 %v242
    %1054 = vmatmul.mubr.f32.gmra.mxu0 %v241
    %v1055 = vpop.f32.mrf.mxu0
    %v1056 = vadd.f32 0.0, %v1055
    %v1057 = vpop.f32.mrf.mxu0
    %v1058 = vadd.f32 0.0, %v1057
    %1059 = vmatprep.mubr.f32.mxu0 %v246
    %1060 = vmatmul.mubr.f32.gmra.mxu0 %v245
    %v1061 = vpop.f32.mrf.mxu0
    %v1062 = vadd.f32 0.0, %v1061
    %v1063 = vpop.f32.mrf.mxu0
    %v1064 = vadd.f32 0.0, %v1063
    %1065 = vmatprep.mubr.f32.mxu0 %v250
    %1066 = vmatmul.mubr.f32.gmra.mxu0 %v249
    %v1067 = vpop.f32.mrf.mxu0
    %v1068 = vadd.f32 0.0, %v1067
    %v1069 = vpop.f32.mrf.mxu0
    %v1070 = vadd.f32 0.0, %v1069
    %1071 = vmatprep.mubr.f32.mxu0 %v254
    %1072 = vmatmul.mubr.f32.gmra.mxu0 %v253
    %v1073 = vpop.f32.mrf.mxu0
    %v1074 = vadd.f32 0.0, %v1073
    %v1075 = vpop.f32.mrf.mxu0
    %v1076 = vadd.f32 0.0, %v1075
    %1077 = vmatprep.mubr.f32.mxu0 %v258
    %1078 = vmatmul.mubr.f32.gmra.mxu0 %v257
    %v1079 = vpop.f32.mrf.mxu0
    %v1080 = vadd.f32 0.0, %v1079
    %v1081 = vpop.f32.mrf.mxu0
    %v1082 = vadd.f32 0.0, %v1081
    %1083 = vmatprep.mubr.f32.mxu0 %v262
    %1084 = vmatmul.mubr.f32.gmra.mxu0 %v261
    %v1085 = vpop.f32.mrf.mxu0
    %v1086 = vadd.f32 0.0, %v1085
    %v1087 = vpop.f32.mrf.mxu0
    %v1088 = vadd.f32 0.0, %v1087
    %1089 = vmatprep.mubr.f32.mxu0 %v266
    %1090 = vmatmul.mubr.f32.gmra.mxu0 %v265
    %v1091 = vpop.f32.mrf.mxu0
    %v1092 = vadd.f32 0.0, %v1091
    %v1093 = vpop.f32.mrf.mxu0
    %v1094 = vadd.f32 0.0, %v1093
    %1095 = vmatprep.mubr.f32.mxu0 %v270
    %1096 = vmatmul.mubr.f32.gmra.mxu0 %v269
    %v1097 = vpop.f32.mrf.mxu0
    %v1098 = vadd.f32 0.0, %v1097
    %v1099 = vpop.f32.mrf.mxu0
    %v1100 = vadd.f32 0.0, %v1099
    %1101 = vmatprep.mubr.f32.mxu0 %v274
    %1102 = vmatmul.mubr.f32.gmra.mxu0 %v273
    %v1103 = vpop.f32.mrf.mxu0
    %v1104 = vadd.f32 0.0, %v1103
    %v1105 = vpop.f32.mrf.mxu0
    %v1106 = vadd.f32 0.0, %v1105
    %1107 = vmatprep.mubr.f32.mxu0 %v278
    %1108 = vmatmul.mubr.f32.gmra.mxu0 %v277
    %v1109 = vpop.f32.mrf.mxu0
    %v1110 = vadd.f32 0.0, %v1109
    %v1111 = vpop.f32.mrf.mxu0
    %v1112 = vadd.f32 0.0, %v1111
    %1113 = vmatprep.mubr.f32.mxu0 %v282
    %1114 = vmatmul.mubr.f32.gmra.mxu0 %v281
    %v1115 = vpop.f32.mrf.mxu0
    %v1116 = vadd.f32 0.0, %v1115
    %v1117 = vpop.f32.mrf.mxu0
    %v1118 = vadd.f32 0.0, %v1117
    %1119 = vmatprep.mubr.f32.mxu0 %v286
    %1120 = vmatmul.mubr.f32.gmra.mxu0 %v285
    %v1121 = vpop.f32.mrf.mxu0
    %v1122 = vadd.f32 0.0, %v1121
    %v1123 = vpop.f32.mrf.mxu0
    %v1124 = vadd.f32 0.0, %v1123
    %1125 = vmatprep.mubr.f32.mxu0 %v290
    %1126 = vmatmul.mubr.f32.gmra.mxu0 %v289
    %v1127 = vpop.f32.mrf.mxu0
    %v1128 = vadd.f32 0.0, %v1127
    %v1129 = vpop.f32.mrf.mxu0
    %v1130 = vadd.f32 0.0, %v1129
    %1131 = vmatprep.mubr.f32.mxu0 %v294
    %1132 = vmatmul.mubr.f32.gmra.mxu0 %v293
    %v1133 = vpop.f32.mrf.mxu0
    %v1134 = vadd.f32 0.0, %v1133
    %v1135 = vpop.f32.mrf.mxu0
    %v1136 = vadd.f32 0.0, %v1135
    %1137 = vmatprep.mubr.f32.mxu0 %v298
    %1138 = vmatmul.mubr.f32.gmra.mxu0 %v297
    %v1139 = vpop.f32.mrf.mxu0
    %v1140 = vadd.f32 0.0, %v1139
    %v1141 = vpop.f32.mrf.mxu0
    %v1142 = vadd.f32 0.0, %v1141
    %1143 = vmatprep.mubr.f32.mxu0 %v302
    %1144 = vmatmul.mubr.f32.gmra.mxu0 %v301
    %v1145 = vpop.f32.mrf.mxu0
    %v1146 = vadd.f32 0.0, %v1145
    %v1147 = vpop.f32.mrf.mxu0
    %v1148 = vadd.f32 0.0, %v1147
    %1149 = vmatprep.mubr.f32.mxu0 %v306
    %1150 = vmatmul.mubr.f32.gmra.mxu0 %v305
    %v1151 = vpop.f32.mrf.mxu0
    %v1152 = vadd.f32 0.0, %v1151
    %v1153 = vpop.f32.mrf.mxu0
    %v1154 = vadd.f32 0.0, %v1153
    %1155 = vmatprep.mubr.f32.mxu0 %v310
    %1156 = vmatmul.mubr.f32.gmra.mxu0 %v309
    %v1157 = vpop.f32.mrf.mxu0
    %v1158 = vadd.f32 0.0, %v1157
    %v1159 = vpop.f32.mrf.mxu0
    %v1160 = vadd.f32 0.0, %v1159
    %1161 = vmatprep.mubr.f32.mxu0 %v314
    %1162 = vmatmul.mubr.f32.gmra.mxu0 %v313
    %v1163 = vpop.f32.mrf.mxu0
    %v1164 = vadd.f32 0.0, %v1163
    %v1165 = vpop.f32.mrf.mxu0
    %v1166 = vadd.f32 0.0, %v1165
    %1167 = vmatprep.mubr.f32.mxu0 %v318
    %1168 = vmatmul.mubr.f32.gmra.mxu0 %v317
    %v1169 = vpop.f32.mrf.mxu0
    %v1170 = vadd.f32 0.0, %v1169
    %v1171 = vpop.f32.mrf.mxu0
    %v1172 = vadd.f32 0.0, %v1171
    %1173 = vmatprep.mubr.f32.mxu0 %v322
    %1174 = vmatmul.mubr.f32.gmra.mxu0 %v321
    %v1175 = vpop.f32.mrf.mxu0
    %v1176 = vadd.f32 0.0, %v1175
    %v1177 = vpop.f32.mrf.mxu0
    %v1178 = vadd.f32 0.0, %v1177
    %1179 = vmatprep.mubr.f32.mxu0 %v326
    %1180 = vmatmul.mubr.f32.gmra.mxu0 %v325
    %v1181 = vpop.f32.mrf.mxu0
    %v1182 = vadd.f32 0.0, %v1181
    %v1183 = vpop.f32.mrf.mxu0
    %v1184 = vadd.f32 0.0, %v1183
    %1185 = vmatprep.mubr.f32.mxu0 %v330
    %1186 = vmatmul.mubr.f32.gmra.mxu0 %v329
    %v1187 = vpop.f32.mrf.mxu0
    %v1188 = vadd.f32 0.0, %v1187
    %v1189 = vpop.f32.mrf.mxu0
    %v1190 = vadd.f32 0.0, %v1189
    %1191 = vmatprep.mubr.f32.mxu0 %v334
    %1192 = vmatmul.mubr.f32.gmra.mxu0 %v333
    %v1193 = vpop.f32.mrf.mxu0
    %v1194 = vadd.f32 0.0, %v1193
    %v1195 = vpop.f32.mrf.mxu0
    %v1196 = vadd.f32 0.0, %v1195
    %1197 = vmatprep.mubr.f32.mxu0 %v338
    %1198 = vmatmul.mubr.f32.gmra.mxu0 %v337
    %v1199 = vpop.f32.mrf.mxu0
    %v1200 = vadd.f32 0.0, %v1199
    %v1201 = vpop.f32.mrf.mxu0
    %v1202 = vadd.f32 0.0, %v1201
    %1203 = vmatprep.mubr.f32.mxu0 %v342
    %1204 = vmatmul.mubr.f32.gmra.mxu0 %v341
    %v1205 = vpop.f32.mrf.mxu0
    %v1206 = vadd.f32 0.0, %v1205
    %v1207 = vpop.f32.mrf.mxu0
    %v1208 = vadd.f32 0.0, %v1207
    %1209 = vmatprep.mubr.f32.mxu0 %v346
    %1210 = vmatmul.mubr.f32.gmra.mxu0 %v345
    %v1211 = vpop.f32.mrf.mxu0
    %v1212 = vadd.f32 0.0, %v1211
    %v1213 = vpop.f32.mrf.mxu0
    %v1214 = vadd.f32 0.0, %v1213
    %1215 = vmatprep.mubr.f32.mxu0 %v350
    %1216 = vmatmul.mubr.f32.gmra.mxu0 %v349
    %v1217 = vpop.f32.mrf.mxu0
    %v1218 = vadd.f32 0.0, %v1217
    %v1219 = vpop.f32.mrf.mxu0
    %v1220 = vadd.f32 0.0, %v1219
    %1221 = vmatprep.mubr.f32.mxu0 %v354
    %1222 = vmatmul.mubr.f32.gmra.mxu0 %v353
    %v1223 = vpop.f32.mrf.mxu0
    %v1224 = vadd.f32 0.0, %v1223
    %v1225 = vpop.f32.mrf.mxu0
    %v1226 = vadd.f32 0.0, %v1225
    %1227 = vmatprep.mubr.f32.mxu0 %v358
    %1228 = vmatmul.mubr.f32.gmra.mxu0 %v357
    %v1229 = vpop.f32.mrf.mxu0
    %v1230 = vadd.f32 0.0, %v1229
    %v1231 = vpop.f32.mrf.mxu0
    %v1232 = vadd.f32 0.0, %v1231
    %1233 = vmatprep.mubr.f32.mxu0 %v362
    %1234 = vmatmul.mubr.f32.gmra.mxu0 %v361
    %v1235 = vpop.f32.mrf.mxu0
    %v1236 = vadd.f32 0.0, %v1235
    %v1237 = vpop.f32.mrf.mxu0
    %v1238 = vadd.f32 0.0, %v1237
    %1239 = vmatprep.mubr.f32.mxu0 %v366
    %1240 = vmatmul.mubr.f32.gmra.mxu0 %v365
    %v1241 = vpop.f32.mrf.mxu0
    %v1242 = vadd.f32 0.0, %v1241
    %v1243 = vpop.f32.mrf.mxu0
    %v1244 = vadd.f32 0.0, %v1243
    %1245 = vmatprep.mubr.f32.mxu0 %v370
    %1246 = vmatmul.mubr.f32.gmra.mxu0 %v369
    %v1247 = vpop.f32.mrf.mxu0
    %v1248 = vadd.f32 0.0, %v1247
    %v1249 = vpop.f32.mrf.mxu0
    %v1250 = vadd.f32 0.0, %v1249
    %1251 = vmatprep.mubr.f32.mxu0 %v374
    %1252 = vmatmul.mubr.f32.gmra.mxu0 %v373
    %v1253 = vpop.f32.mrf.mxu0
    %v1254 = vadd.f32 0.0, %v1253
    %v1255 = vpop.f32.mrf.mxu0
    %v1256 = vadd.f32 0.0, %v1255
    %1257 = vmatprep.mubr.f32.mxu0 %v378
    %1258 = vmatmul.mubr.f32.gmra.mxu0 %v377
    %v1259 = vpop.f32.mrf.mxu0
    %v1260 = vadd.f32 0.0, %v1259
    %v1261 = vpop.f32.mrf.mxu0
    %v1262 = vadd.f32 0.0, %v1261
    %1263 = vmatprep.mubr.f32.mxu0 %v382
    %1264 = vmatmul.mubr.f32.gmra.mxu0 %v381
    %v1265 = vpop.f32.mrf.mxu0
    %v1266 = vadd.f32 0.0, %v1265
    %v1267 = vpop.f32.mrf.mxu0
    %v1268 = vadd.f32 0.0, %v1267
    %1269 = vmatprep.mubr.f32.mxu0 %v386
    %1270 = vmatmul.mubr.f32.gmra.mxu0 %v385
    %v1271 = vpop.f32.mrf.mxu0
    %v1272 = vadd.f32 0.0, %v1271
    %v1273 = vpop.f32.mrf.mxu0
    %v1274 = vadd.f32 0.0, %v1273
    %1275 = vmatprep.mubr.f32.mxu0 %v390
    %1276 = vmatmul.mubr.f32.gmra.mxu0 %v389
    %v1277 = vpop.f32.mrf.mxu0
    %v1278 = vadd.f32 0.0, %v1277
    %v1279 = vpop.f32.mrf.mxu0
    %v1280 = vadd.f32 0.0, %v1279
    %1281 = vmatprep.mubr.f32.mxu0 %v394
    %1282 = vmatmul.mubr.f32.gmra.mxu0 %v393
    %v1283 = vpop.f32.mrf.mxu0
    %v1284 = vadd.f32 0.0, %v1283
    %v1285 = vpop.f32.mrf.mxu0
    %v1286 = vadd.f32 0.0, %v1285
    %1287 = vmatprep.mubr.f32.mxu0 %v398
    %1288 = vmatmul.mubr.f32.gmra.mxu0 %v397
    %v1289 = vpop.f32.mrf.mxu0
    %v1290 = vadd.f32 0.0, %v1289
    %v1291 = vpop.f32.mrf.mxu0
    %v1292 = vadd.f32 0.0, %v1291
    %1293 = vmatprep.mubr.f32.mxu0 %v402
    %1294 = vmatmul.mubr.f32.gmra.mxu0 %v401
    %v1295 = vpop.f32.mrf.mxu0
    %v1296 = vadd.f32 0.0, %v1295
    %v1297 = vpop.f32.mrf.mxu0
    %v1298 = vadd.f32 0.0, %v1297
    %1299 = vmatprep.mubr.f32.mxu0 %v406
    %1300 = vmatmul.mubr.f32.gmra.mxu0 %v405
    %v1301 = vpop.f32.mrf.mxu0
    %v1302 = vadd.f32 0.0, %v1301
    %v1303 = vpop.f32.mrf.mxu0
    %v1304 = vadd.f32 0.0, %v1303
    %1305 = vmatprep.mubr.f32.mxu0 %v410
    %1306 = vmatmul.mubr.f32.gmra.mxu0 %v409
    %v1307 = vpop.f32.mrf.mxu0
    %v1308 = vadd.f32 0.0, %v1307
    %v1309 = vpop.f32.mrf.mxu0
    %v1310 = vadd.f32 0.0, %v1309
    %1311 = vmatprep.mubr.f32.mxu0 %v414
    %1312 = vmatmul.mubr.f32.gmra.mxu0 %v413
    %v1313 = vpop.f32.mrf.mxu0
    %v1314 = vadd.f32 0.0, %v1313
    %v1315 = vpop.f32.mrf.mxu0
    %v1316 = vadd.f32 0.0, %v1315
    %1317 = vmatprep.mubr.f32.mxu0 %v418
    %1318 = vmatmul.mubr.f32.gmra.mxu0 %v417
    %v1319 = vpop.f32.mrf.mxu0
    %v1320 = vadd.f32 0.0, %v1319
    %v1321 = vpop.f32.mrf.mxu0
    %v1322 = vadd.f32 0.0, %v1321
    %1323 = vmatprep.mubr.f32.mxu0 %v422
    %1324 = vmatmul.mubr.f32.gmra.mxu0 %v421
    %v1325 = vpop.f32.mrf.mxu0
    %v1326 = vadd.f32 0.0, %v1325
    %v1327 = vpop.f32.mrf.mxu0
    %v1328 = vadd.f32 0.0, %v1327
    %1329 = vmatprep.mubr.f32.mxu0 %v426
    %1330 = vmatmul.mubr.f32.gmra.mxu0 %v425
    %v1331 = vpop.f32.mrf.mxu0
    %v1332 = vadd.f32 0.0, %v1331
    %v1333 = vpop.f32.mrf.mxu0
    %v1334 = vadd.f32 0.0, %v1333
    %1335 = vmatprep.mubr.f32.mxu0 %v430
    %1336 = vmatmul.mubr.f32.gmra.mxu0 %v429
    %v1337 = vpop.f32.mrf.mxu0
    %v1338 = vadd.f32 0.0, %v1337
    %v1339 = vpop.f32.mrf.mxu0
    %v1340 = vadd.f32 0.0, %v1339
    %1341 = vmatprep.mubr.f32.mxu0 %v434
    %1342 = vmatmul.mubr.f32.gmra.mxu0 %v433
    %v1343 = vpop.f32.mrf.mxu0
    %v1344 = vadd.f32 0.0, %v1343
    %v1345 = vpop.f32.mrf.mxu0
    %v1346 = vadd.f32 0.0, %v1345
    %1347 = vmatprep.mubr.f32.mxu0 %v438
    %1348 = vmatmul.mubr.f32.gmra.mxu0 %v437
    %v1349 = vpop.f32.mrf.mxu0
    %v1350 = vadd.f32 0.0, %v1349
    %v1351 = vpop.f32.mrf.mxu0
    %v1352 = vadd.f32 0.0, %v1351
    %1353 = vmatprep.mubr.f32.mxu0 %v442
    %1354 = vmatmul.mubr.f32.gmra.mxu0 %v441
    %v1355 = vpop.f32.mrf.mxu0
    %v1356 = vadd.f32 0.0, %v1355
    %v1357 = vpop.f32.mrf.mxu0
    %v1358 = vadd.f32 0.0, %v1357
    %1359 = vmatprep.mubr.f32.mxu0 %v446
    %1360 = vmatmul.mubr.f32.gmra.mxu0 %v445
    %v1361 = vpop.f32.mrf.mxu0
    %v1362 = vadd.f32 0.0, %v1361
    %v1363 = vpop.f32.mrf.mxu0
    %v1364 = vadd.f32 0.0, %v1363
    %1365 = vmatprep.mubr.f32.mxu0 %v450
    %1366 = vmatmul.mubr.f32.gmra.mxu0 %v449
    %v1367 = vpop.f32.mrf.mxu0
    %v1368 = vadd.f32 0.0, %v1367
    %v1369 = vpop.f32.mrf.mxu0
    %v1370 = vadd.f32 0.0, %v1369
    %1371 = vmatprep.mubr.f32.mxu0 %v454
    %1372 = vmatmul.mubr.f32.gmra.mxu0 %v453
    %v1373 = vpop.f32.mrf.mxu0
    %v1374 = vadd.f32 0.0, %v1373
    %v1375 = vpop.f32.mrf.mxu0
    %v1376 = vadd.f32 0.0, %v1375
    %1377 = vmatprep.mubr.f32.mxu0 %v458
    %1378 = vmatmul.mubr.f32.gmra.mxu0 %v457
    %v1379 = vpop.f32.mrf.mxu0
    %v1380 = vadd.f32 0.0, %v1379
    %v1381 = vpop.f32.mrf.mxu0
    %v1382 = vadd.f32 0.0, %v1381
    %1383 = vmatprep.mubr.f32.mxu0 %v462
    %1384 = vmatmul.mubr.f32.gmra.mxu0 %v461
    %v1385 = vpop.f32.mrf.mxu0
    %v1386 = vadd.f32 0.0, %v1385
    %v1387 = vpop.f32.mrf.mxu0
    %v1388 = vadd.f32 0.0, %v1387
    %1389 = vmatprep.mubr.f32.mxu0 %v466
    %1390 = vmatmul.mubr.f32.gmra.mxu0 %v465
    %v1391 = vpop.f32.mrf.mxu0
    %v1392 = vadd.f32 0.0, %v1391
    %v1393 = vpop.f32.mrf.mxu0
    %v1394 = vadd.f32 0.0, %v1393
    %1395 = vmatprep.mubr.f32.mxu0 %v470
    %1396 = vmatmul.mubr.f32.gmra.mxu0 %v469
    %v1397 = vpop.f32.mrf.mxu0
    %v1398 = vadd.f32 0.0, %v1397
    %v1399 = vpop.f32.mrf.mxu0
    %v1400 = vadd.f32 0.0, %v1399
    %1401 = vmatprep.mubr.f32.mxu0 %v474
    %1402 = vmatmul.mubr.f32.gmra.mxu0 %v473
    %v1403 = vpop.f32.mrf.mxu0
    %v1404 = vadd.f32 0.0, %v1403
    %v1405 = vpop.f32.mrf.mxu0
    %v1406 = vadd.f32 0.0, %v1405
    %1407 = vmatprep.mubr.f32.mxu0 %v478
    %1408 = vmatmul.mubr.f32.gmra.mxu0 %v477
    %v1409 = vpop.f32.mrf.mxu0
    %v1410 = vadd.f32 0.0, %v1409
    %v1411 = vpop.f32.mrf.mxu0
    %v1412 = vadd.f32 0.0, %v1411
    %1413 = vmatprep.mubr.f32.mxu0 %v482
    %1414 = vmatmul.mubr.f32.gmra.mxu0 %v481
    %v1415 = vpop.f32.mrf.mxu0
    %v1416 = vadd.f32 0.0, %v1415
    %v1417 = vpop.f32.mrf.mxu0
    %v1418 = vadd.f32 0.0, %v1417
    %1419 = vmatprep.mubr.f32.mxu0 %v486
    %1420 = vmatmul.mubr.f32.gmra.mxu0 %v485
    %v1421 = vpop.f32.mrf.mxu0
    %v1422 = vadd.f32 0.0, %v1421
    %v1423 = vpop.f32.mrf.mxu0
    %v1424 = vadd.f32 0.0, %v1423
    %1425 = vmatprep.mubr.f32.mxu0 %v490
    %1426 = vmatmul.mubr.f32.gmra.mxu0 %v489
    %v1427 = vpop.f32.mrf.mxu0
    %v1428 = vadd.f32 0.0, %v1427
    %v1429 = vpop.f32.mrf.mxu0
    %v1430 = vadd.f32 0.0, %v1429
    %1431 = vmatprep.mubr.f32.mxu0 %v494
    %1432 = vmatmul.mubr.f32.gmra.mxu0 %v493
    %v1433 = vpop.f32.mrf.mxu0
    %v1434 = vadd.f32 0.0, %v1433
    %v1435 = vpop.f32.mrf.mxu0
    %v1436 = vadd.f32 0.0, %v1435
    %1437 = vmatprep.mubr.f32.mxu0 %v498
    %1438 = vmatmul.mubr.f32.gmra.mxu0 %v497
    %v1439 = vpop.f32.mrf.mxu0
    %v1440 = vadd.f32 0.0, %v1439
    %v1441 = vpop.f32.mrf.mxu0
    %v1442 = vadd.f32 0.0, %v1441
    %1443 = vmatprep.mubr.f32.mxu0 %v502
    %1444 = vmatmul.mubr.f32.gmra.mxu0 %v501
    %v1445 = vpop.f32.mrf.mxu0
    %v1446 = vadd.f32 0.0, %v1445
    %v1447 = vpop.f32.mrf.mxu0
    %v1448 = vadd.f32 0.0, %v1447
    %1449 = vmatprep.mubr.f32.mxu0 %v506
    %1450 = vmatmul.mubr.f32.gmra.mxu0 %v505
    %v1451 = vpop.f32.mrf.mxu0
    %v1452 = vadd.f32 0.0, %v1451
    %v1453 = vpop.f32.mrf.mxu0
    %v1454 = vadd.f32 0.0, %v1453
    %1455 = vmatprep.mubr.f32.mxu0 %v510
    %1456 = vmatmul.mubr.f32.gmra.mxu0 %v509
    %v1457 = vpop.f32.mrf.mxu0
    %v1458 = vadd.f32 0.0, %v1457
    %v1459 = vpop.f32.mrf.mxu0
    %v1460 = vadd.f32 0.0, %v1459
    %1461 = vmatprep.mubr.f32.mxu0 %v514
    %1462 = vmatmul.mubr.f32.gmra.mxu0 %v513
    %v1463 = vpop.f32.mrf.mxu0
    %v1464 = vadd.f32 0.0, %v1463
    %v1465 = vpop.f32.mrf.mxu0
    %v1466 = vadd.f32 0.0, %v1465
    %1467 = vmatprep.mubr.f32.mxu0 %v518
    %1468 = vmatmul.mubr.f32.gmra.mxu0 %v517
    %v1469 = vpop.f32.mrf.mxu0
    %v1470 = vadd.f32 0.0, %v1469
    %v1471 = vpop.f32.mrf.mxu0
    %v1472 = vadd.f32 0.0, %v1471
    %1473 = vmatprep.mubr.f32.mxu0 %v522
    %1474 = vmatmul.mubr.f32.gmra.mxu0 %v521
    %v1475 = vpop.f32.mrf.mxu0
    %v1476 = vadd.f32 0.0, %v1475
    %v1477 = vpop.f32.mrf.mxu0
    %v1478 = vadd.f32 0.0, %v1477
    %1479 = vmatprep.mubr.f32.mxu0 %v526
    %1480 = vmatmul.mubr.f32.gmra.mxu0 %v525
    %v1481 = vpop.f32.mrf.mxu0
    %v1482 = vadd.f32 0.0, %v1481
    %v1483 = vpop.f32.mrf.mxu0
    %v1484 = vadd.f32 0.0, %v1483
    %1485 = vmatprep.mubr.f32.mxu0 %v530
    %1486 = vmatmul.mubr.f32.gmra.mxu0 %v529
    %v1487 = vpop.f32.mrf.mxu0
    %v1488 = vadd.f32 0.0, %v1487
    %v1489 = vpop.f32.mrf.mxu0
    %v1490 = vadd.f32 0.0, %v1489
    %1491 = vmatprep.mubr.f32.mxu0 %v534
    %1492 = vmatmul.mubr.f32.gmra.mxu0 %v533
    %v1493 = vpop.f32.mrf.mxu0
    %v1494 = vadd.f32 0.0, %v1493
    %v1495 = vpop.f32.mrf.mxu0
    %v1496 = vadd.f32 0.0, %v1495
    %1497 = vdwg.mxu0
    %1498 = vmatprep.subr.mxu0 %v632
    %1499 = vmatpush1.msra.mxu0 %v631
    %1500 = vmatprep.subr.mxu0 %v630
    %1501 = vmatpush1.msra.mxu0 %v629
    %1502 = vmatprep.subr.mxu0 %v628
    %1503 = vmatpush1.msra.mxu0 %v627
    %1504 = vmatprep.subr.mxu0 %v626
    %1505 = vmatpush1.msra.mxu0 %v625
    %1506 = vmatprep.subr.mxu0 %v624
    %1507 = vmatpush1.msra.mxu0 %v623
    %1508 = vmatprep.subr.mxu0 %v622
    %1509 = vmatpush1.msra.mxu0 %v621
    %1510 = vmatprep.subr.mxu0 %v620
    %1511 = vmatpush1.msra.mxu0 %v619
    %1512 = vmatprep.subr.mxu0 %v618
    %1513 = vmatpush1.msra.mxu0 %v617
    %1514 = vmatprep.subr.mxu0 %v616
    %1515 = vmatpush1.msra.mxu0 %v615
    %1516 = vmatprep.subr.mxu0 %v614
    %1517 = vmatpush1.msra.mxu0 %v613
    %1518 = vmatprep.subr.mxu0 %v612
    %1519 = vmatpush1.msra.mxu0 %v611
    %1520 = vmatprep.subr.mxu0 %v610
    %1521 = vmatpush1.msra.mxu0 %v609
    %1522 = vmatprep.subr.mxu0 %v608
    %1523 = vmatpush1.msra.mxu0 %v607
    %1524 = vmatprep.subr.mxu0 %v606
    %1525 = vmatpush1.msra.mxu0 %v605
    %1526 = vmatprep.subr.mxu0 %v604
    %1527 = vmatpush1.msra.mxu0 %v603
    %1528 = vmatprep.subr.mxu0 %v602
    %1529 = vmatpush1.msra.mxu0 %v601
    %1530 = vmatprep.subr.mxu0 %v664
    %1531 = vmatpush2.msra.mxu0 %v663
    %1532 = vmatprep.subr.mxu0 %v662
    %1533 = vmatpush2.msra.mxu0 %v661
    %1534 = vmatprep.subr.mxu0 %v660
    %1535 = vmatpush2.msra.mxu0 %v659
    %1536 = vmatprep.subr.mxu0 %v658
    %1537 = vmatpush2.msra.mxu0 %v657
    %1538 = vmatprep.subr.mxu0 %v656
    %1539 = vmatpush2.msra.mxu0 %v655
    %1540 = vmatprep.subr.mxu0 %v654
    %1541 = vmatpush2.msra.mxu0 %v653
    %1542 = vmatprep.subr.mxu0 %v652
    %1543 = vmatpush2.msra.mxu0 %v651
    %1544 = vmatprep.subr.mxu0 %v650
    %1545 = vmatpush2.msra.mxu0 %v649
    %1546 = vmatprep.subr.mxu0 %v648
    %1547 = vmatpush2.msra.mxu0 %v647
    %1548 = vmatprep.subr.mxu0 %v646
    %1549 = vmatpush2.msra.mxu0 %v645
    %1550 = vmatprep.subr.mxu0 %v644
    %1551 = vmatpush2.msra.mxu0 %v643
    %1552 = vmatprep.subr.mxu0 %v642
    %1553 = vmatpush2.msra.mxu0 %v641
    %1554 = vmatprep.subr.mxu0 %v640
    %1555 = vmatpush2.msra.mxu0 %v639
    %1556 = vmatprep.subr.mxu0 %v638
    %1557 = vmatpush2.msra.mxu0 %v637
    %1558 = vmatprep.subr.mxu0 %v636
    %1559 = vmatpush2.msra.mxu0 %v635
    %1560 = vmatprep.subr.mxu0 %v634
    %1561 = vmatpush2.msra.mxu0 %v633
    %1562 = vmatprep.mubr.f32.mxu0 %v28
    %1563 = vmatmul.mubr.f32.gmra.mxu0 %v27
    %v1564 = vpop.f32.mrf.mxu0
    %v1565 = vadd.f32 %v732, %v1564
    %v1566 = vpop.f32.mrf.mxu0
    %v1567 = vadd.f32 %v734, %v1566
    %1568 = vmatprep.mubr.f32.mxu0 %v32
    %1569 = vmatmul.mubr.f32.gmra.mxu0 %v31
    %v1570 = vpop.f32.mrf.mxu0
    %v1571 = vadd.f32 %v738, %v1570
    %v1572 = vpop.f32.mrf.mxu0
    %v1573 = vadd.f32 %v740, %v1572
    %1574 = vmatprep.mubr.f32.mxu0 %v36
    %1575 = vmatmul.mubr.f32.gmra.mxu0 %v35
    %v1576 = vpop.f32.mrf.mxu0
    %v1577 = vadd.f32 %v744, %v1576
    %v1578 = vpop.f32.mrf.mxu0
    %v1579 = vadd.f32 %v746, %v1578
    %1580 = vmatprep.mubr.f32.mxu0 %v40
    %1581 = vmatmul.mubr.f32.gmra.mxu0 %v39
    %v1582 = vpop.f32.mrf.mxu0
    %v1583 = vadd.f32 %v750, %v1582
    %v1584 = vpop.f32.mrf.mxu0
    %v1585 = vadd.f32 %v752, %v1584
    %1586 = vmatprep.mubr.f32.mxu0 %v44
    %1587 = vmatmul.mubr.f32.gmra.mxu0 %v43
    %v1588 = vpop.f32.mrf.mxu0
    %v1589 = vadd.f32 %v756, %v1588
    %v1590 = vpop.f32.mrf.mxu0
    %v1591 = vadd.f32 %v758, %v1590
    %1592 = vmatprep.mubr.f32.mxu0 %v48
    %1593 = vmatmul.mubr.f32.gmra.mxu0 %v47
    %v1594 = vpop.f32.mrf.mxu0
    %v1595 = vadd.f32 %v762, %v1594
    %v1596 = vpop.f32.mrf.mxu0
    %v1597 = vadd.f32 %v764, %v1596
    %1598 = vmatprep.mubr.f32.mxu0 %v52
    %1599 = vmatmul.mubr.f32.gmra.mxu0 %v51
    %v1600 = vpop.f32.mrf.mxu0
    %v1601 = vadd.f32 %v768, %v1600
    %v1602 = vpop.f32.mrf.mxu0
    %v1603 = vadd.f32 %v770, %v1602
    %1604 = vmatprep.mubr.f32.mxu0 %v56
    %1605 = vmatmul.mubr.f32.gmra.mxu0 %v55
    %v1606 = vpop.f32.mrf.mxu0
    %v1607 = vadd.f32 %v774, %v1606
    %v1608 = vpop.f32.mrf.mxu0
    %v1609 = vadd.f32 %v776, %v1608
    %1610 = vmatprep.mubr.f32.mxu0 %v60
    %1611 = vmatmul.mubr.f32.gmra.mxu0 %v59
    %v1612 = vpop.f32.mrf.mxu0
    %v1613 = vadd.f32 %v780, %v1612
    %v1614 = vpop.f32.mrf.mxu0
    %v1615 = vadd.f32 %v782, %v1614
    %1616 = vmatprep.mubr.f32.mxu0 %v64
    %1617 = vmatmul.mubr.f32.gmra.mxu0 %v63
    %v1618 = vpop.f32.mrf.mxu0
    %v1619 = vadd.f32 %v786, %v1618
    %v1620 = vpop.f32.mrf.mxu0
    %v1621 = vadd.f32 %v788, %v1620
    %1622 = vmatprep.mubr.f32.mxu0 %v68
    %1623 = vmatmul.mubr.f32.gmra.mxu0 %v67
    %v1624 = vpop.f32.mrf.mxu0
    %v1625 = vadd.f32 %v792, %v1624
    %v1626 = vpop.f32.mrf.mxu0
    %v1627 = vadd.f32 %v794, %v1626
    %1628 = vmatprep.mubr.f32.mxu0 %v72
    %1629 = vmatmul.mubr.f32.gmra.mxu0 %v71
    %v1630 = vpop.f32.mrf.mxu0
    %v1631 = vadd.f32 %v798, %v1630
    %v1632 = vpop.f32.mrf.mxu0
    %v1633 = vadd.f32 %v800, %v1632
    %1634 = vmatprep.mubr.f32.mxu0 %v76
    %1635 = vmatmul.mubr.f32.gmra.mxu0 %v75
    %v1636 = vpop.f32.mrf.mxu0
    %v1637 = vadd.f32 %v804, %v1636
    %v1638 = vpop.f32.mrf.mxu0
    %v1639 = vadd.f32 %v806, %v1638
    %1640 = vmatprep.mubr.f32.mxu0 %v80
    %1641 = vmatmul.mubr.f32.gmra.mxu0 %v79
    %v1642 = vpop.f32.mrf.mxu0
    %v1643 = vadd.f32 %v810, %v1642
    %v1644 = vpop.f32.mrf.mxu0
    %v1645 = vadd.f32 %v812, %v1644
    %1646 = vmatprep.mubr.f32.mxu0 %v84
    %1647 = vmatmul.mubr.f32.gmra.mxu0 %v83
    %v1648 = vpop.f32.mrf.mxu0
    %v1649 = vadd.f32 %v816, %v1648
    %v1650 = vpop.f32.mrf.mxu0
    %v1651 = vadd.f32 %v818, %v1650
    %1652 = vmatprep.mubr.f32.mxu0 %v88
    %1653 = vmatmul.mubr.f32.gmra.mxu0 %v87
    %v1654 = vpop.f32.mrf.mxu0
    %v1655 = vadd.f32 %v822, %v1654
    %v1656 = vpop.f32.mrf.mxu0
    %v1657 = vadd.f32 %v824, %v1656
    %1658 = vmatprep.mubr.f32.mxu0 %v92
    %1659 = vmatmul.mubr.f32.gmra.mxu0 %v91
    %v1660 = vpop.f32.mrf.mxu0
    %v1661 = vadd.f32 %v828, %v1660
    %v1662 = vpop.f32.mrf.mxu0
    %v1663 = vadd.f32 %v830, %v1662
    %1664 = vmatprep.mubr.f32.mxu0 %v96
    %1665 = vmatmul.mubr.f32.gmra.mxu0 %v95
    %v1666 = vpop.f32.mrf.mxu0
    %v1667 = vadd.f32 %v834, %v1666
    %v1668 = vpop.f32.mrf.mxu0
    %v1669 = vadd.f32 %v836, %v1668
    %1670 = vmatprep.mubr.f32.mxu0 %v100
    %1671 = vmatmul.mubr.f32.gmra.mxu0 %v99
    %v1672 = vpop.f32.mrf.mxu0
    %v1673 = vadd.f32 %v840, %v1672
    %v1674 = vpop.f32.mrf.mxu0
    %v1675 = vadd.f32 %v842, %v1674
    %1676 = vmatprep.mubr.f32.mxu0 %v104
    %1677 = vmatmul.mubr.f32.gmra.mxu0 %v103
    %v1678 = vpop.f32.mrf.mxu0
    %v1679 = vadd.f32 %v846, %v1678
    %v1680 = vpop.f32.mrf.mxu0
    %v1681 = vadd.f32 %v848, %v1680
    %1682 = vmatprep.mubr.f32.mxu0 %v108
    %1683 = vmatmul.mubr.f32.gmra.mxu0 %v107
    %v1684 = vpop.f32.mrf.mxu0
    %v1685 = vadd.f32 %v852, %v1684
    %v1686 = vpop.f32.mrf.mxu0
    %v1687 = vadd.f32 %v854, %v1686
    %1688 = vmatprep.mubr.f32.mxu0 %v112
    %1689 = vmatmul.mubr.f32.gmra.mxu0 %v111
    %v1690 = vpop.f32.mrf.mxu0
    %v1691 = vadd.f32 %v858, %v1690
    %v1692 = vpop.f32.mrf.mxu0
    %v1693 = vadd.f32 %v860, %v1692
    %1694 = vmatprep.mubr.f32.mxu0 %v116
    %1695 = vmatmul.mubr.f32.gmra.mxu0 %v115
    %v1696 = vpop.f32.mrf.mxu0
    %v1697 = vadd.f32 %v864, %v1696
    %v1698 = vpop.f32.mrf.mxu0
    %v1699 = vadd.f32 %v866, %v1698
    %1700 = vmatprep.mubr.f32.mxu0 %v120
    %1701 = vmatmul.mubr.f32.gmra.mxu0 %v119
    %v1702 = vpop.f32.mrf.mxu0
    %v1703 = vadd.f32 %v870, %v1702
    %v1704 = vpop.f32.mrf.mxu0
    %v1705 = vadd.f32 %v872, %v1704
    %1706 = vmatprep.mubr.f32.mxu0 %v124
    %1707 = vmatmul.mubr.f32.gmra.mxu0 %v123
    %v1708 = vpop.f32.mrf.mxu0
    %v1709 = vadd.f32 %v876, %v1708
    %v1710 = vpop.f32.mrf.mxu0
    %v1711 = vadd.f32 %v878, %v1710
    %1712 = vmatprep.mubr.f32.mxu0 %v128
    %1713 = vmatmul.mubr.f32.gmra.mxu0 %v127
    %v1714 = vpop.f32.mrf.mxu0
    %v1715 = vadd.f32 %v882, %v1714
    %v1716 = vpop.f32.mrf.mxu0
    %v1717 = vadd.f32 %v884, %v1716
    %1718 = vmatprep.mubr.f32.mxu0 %v132
    %1719 = vmatmul.mubr.f32.gmra.mxu0 %v131
    %v1720 = vpop.f32.mrf.mxu0
    %v1721 = vadd.f32 %v888, %v1720
    %v1722 = vpop.f32.mrf.mxu0
    %v1723 = vadd.f32 %v890, %v1722
    %1724 = vmatprep.mubr.f32.mxu0 %v136
    %1725 = vmatmul.mubr.f32.gmra.mxu0 %v135
    %v1726 = vpop.f32.mrf.mxu0
    %v1727 = vadd.f32 %v894, %v1726
    %v1728 = vpop.f32.mrf.mxu0
    %v1729 = vadd.f32 %v896, %v1728
    %1730 = vmatprep.mubr.f32.mxu0 %v140
    %1731 = vmatmul.mubr.f32.gmra.mxu0 %v139
    %v1732 = vpop.f32.mrf.mxu0
    %v1733 = vadd.f32 %v900, %v1732
    %v1734 = vpop.f32.mrf.mxu0
    %v1735 = vadd.f32 %v902, %v1734
    %1736 = vmatprep.mubr.f32.mxu0 %v144
    %1737 = vmatmul.mubr.f32.gmra.mxu0 %v143
    %v1738 = vpop.f32.mrf.mxu0
    %v1739 = vadd.f32 %v906, %v1738
    %v1740 = vpop.f32.mrf.mxu0
    %v1741 = vadd.f32 %v908, %v1740
    %1742 = vmatprep.mubr.f32.mxu0 %v148
    %1743 = vmatmul.mubr.f32.gmra.mxu0 %v147
    %v1744 = vpop.f32.mrf.mxu0
    %v1745 = vadd.f32 %v912, %v1744
    %v1746 = vpop.f32.mrf.mxu0
    %v1747 = vadd.f32 %v914, %v1746
    %1748 = vmatprep.mubr.f32.mxu0 %v152
    %1749 = vmatmul.mubr.f32.gmra.mxu0 %v151
    %v1750 = vpop.f32.mrf.mxu0
    %v1751 = vadd.f32 %v918, %v1750
    %v1752 = vpop.f32.mrf.mxu0
    %v1753 = vadd.f32 %v920, %v1752
    %1754 = vmatprep.mubr.f32.mxu0 %v156
    %1755 = vmatmul.mubr.f32.gmra.mxu0 %v155
    %v1756 = vpop.f32.mrf.mxu0
    %v1757 = vadd.f32 %v924, %v1756
    %v1758 = vpop.f32.mrf.mxu0
    %v1759 = vadd.f32 %v926, %v1758
    %1760 = vmatprep.mubr.f32.mxu0 %v160
    %1761 = vmatmul.mubr.f32.gmra.mxu0 %v159
    %v1762 = vpop.f32.mrf.mxu0
    %v1763 = vadd.f32 %v930, %v1762
    %v1764 = vpop.f32.mrf.mxu0
    %v1765 = vadd.f32 %v932, %v1764
    %1766 = vmatprep.mubr.f32.mxu0 %v164
    %1767 = vmatmul.mubr.f32.gmra.mxu0 %v163
    %v1768 = vpop.f32.mrf.mxu0
    %v1769 = vadd.f32 %v936, %v1768
    %v1770 = vpop.f32.mrf.mxu0
    %v1771 = vadd.f32 %v938, %v1770
    %1772 = vmatprep.mubr.f32.mxu0 %v168
    %1773 = vmatmul.mubr.f32.gmra.mxu0 %v167
    %v1774 = vpop.f32.mrf.mxu0
    %v1775 = vadd.f32 %v942, %v1774
    %v1776 = vpop.f32.mrf.mxu0
    %v1777 = vadd.f32 %v944, %v1776
    %1778 = vmatprep.mubr.f32.mxu0 %v172
    %1779 = vmatmul.mubr.f32.gmra.mxu0 %v171
    %v1780 = vpop.f32.mrf.mxu0
    %v1781 = vadd.f32 %v948, %v1780
    %v1782 = vpop.f32.mrf.mxu0
    %v1783 = vadd.f32 %v950, %v1782
    %1784 = vmatprep.mubr.f32.mxu0 %v176
    %1785 = vmatmul.mubr.f32.gmra.mxu0 %v175
    %v1786 = vpop.f32.mrf.mxu0
    %v1787 = vadd.f32 %v954, %v1786
    %v1788 = vpop.f32.mrf.mxu0
    %v1789 = vadd.f32 %v956, %v1788
    %1790 = vmatprep.mubr.f32.mxu0 %v180
    %1791 = vmatmul.mubr.f32.gmra.mxu0 %v179
    %v1792 = vpop.f32.mrf.mxu0
    %v1793 = vadd.f32 %v960, %v1792
    %v1794 = vpop.f32.mrf.mxu0
    %v1795 = vadd.f32 %v962, %v1794
    %1796 = vmatprep.mubr.f32.mxu0 %v184
    %1797 = vmatmul.mubr.f32.gmra.mxu0 %v183
    %v1798 = vpop.f32.mrf.mxu0
    %v1799 = vadd.f32 %v966, %v1798
    %v1800 = vpop.f32.mrf.mxu0
    %v1801 = vadd.f32 %v968, %v1800
    %1802 = vmatprep.mubr.f32.mxu0 %v188
    %1803 = vmatmul.mubr.f32.gmra.mxu0 %v187
    %v1804 = vpop.f32.mrf.mxu0
    %v1805 = vadd.f32 %v972, %v1804
    %v1806 = vpop.f32.mrf.mxu0
    %v1807 = vadd.f32 %v974, %v1806
    %1808 = vmatprep.mubr.f32.mxu0 %v192
    %1809 = vmatmul.mubr.f32.gmra.mxu0 %v191
    %v1810 = vpop.f32.mrf.mxu0
    %v1811 = vadd.f32 %v978, %v1810
    %v1812 = vpop.f32.mrf.mxu0
    %v1813 = vadd.f32 %v980, %v1812
    %1814 = vmatprep.mubr.f32.mxu0 %v196
    %1815 = vmatmul.mubr.f32.gmra.mxu0 %v195
    %v1816 = vpop.f32.mrf.mxu0
    %v1817 = vadd.f32 %v984, %v1816
    %v1818 = vpop.f32.mrf.mxu0
    %v1819 = vadd.f32 %v986, %v1818
    %1820 = vmatprep.mubr.f32.mxu0 %v200
    %1821 = vmatmul.mubr.f32.gmra.mxu0 %v199
    %v1822 = vpop.f32.mrf.mxu0
    %v1823 = vadd.f32 %v990, %v1822
    %v1824 = vpop.f32.mrf.mxu0
    %v1825 = vadd.f32 %v992, %v1824
    %1826 = vmatprep.mubr.f32.mxu0 %v204
    %1827 = vmatmul.mubr.f32.gmra.mxu0 %v203
    %v1828 = vpop.f32.mrf.mxu0
    %v1829 = vadd.f32 %v996, %v1828
    %v1830 = vpop.f32.mrf.mxu0
    %v1831 = vadd.f32 %v998, %v1830
    %1832 = vmatprep.mubr.f32.mxu0 %v208
    %1833 = vmatmul.mubr.f32.gmra.mxu0 %v207
    %v1834 = vpop.f32.mrf.mxu0
    %v1835 = vadd.f32 %v1002, %v1834
    %v1836 = vpop.f32.mrf.mxu0
    %v1837 = vadd.f32 %v1004, %v1836
    %1838 = vmatprep.mubr.f32.mxu0 %v212
    %1839 = vmatmul.mubr.f32.gmra.mxu0 %v211
    %v1840 = vpop.f32.mrf.mxu0
    %v1841 = vadd.f32 %v1008, %v1840
    %v1842 = vpop.f32.mrf.mxu0
    %v1843 = vadd.f32 %v1010, %v1842
    %1844 = vmatprep.mubr.f32.mxu0 %v216
    %1845 = vmatmul.mubr.f32.gmra.mxu0 %v215
    %v1846 = vpop.f32.mrf.mxu0
    %v1847 = vadd.f32 %v1014, %v1846
    %v1848 = vpop.f32.mrf.mxu0
    %v1849 = vadd.f32 %v1016, %v1848
    %1850 = vmatprep.mubr.f32.mxu0 %v220
    %1851 = vmatmul.mubr.f32.gmra.mxu0 %v219
    %v1852 = vpop.f32.mrf.mxu0
    %v1853 = vadd.f32 %v1020, %v1852
    %v1854 = vpop.f32.mrf.mxu0
    %v1855 = vadd.f32 %v1022, %v1854
    %1856 = vmatprep.mubr.f32.mxu0 %v224
    %1857 = vmatmul.mubr.f32.gmra.mxu0 %v223
    %v1858 = vpop.f32.mrf.mxu0
    %v1859 = vadd.f32 %v1026, %v1858
    %v1860 = vpop.f32.mrf.mxu0
    %v1861 = vadd.f32 %v1028, %v1860
    %1862 = vmatprep.mubr.f32.mxu0 %v228
    %1863 = vmatmul.mubr.f32.gmra.mxu0 %v227
    %v1864 = vpop.f32.mrf.mxu0
    %v1865 = vadd.f32 %v1032, %v1864
    %v1866 = vpop.f32.mrf.mxu0
    %v1867 = vadd.f32 %v1034, %v1866
    %1868 = vmatprep.mubr.f32.mxu0 %v232
    %1869 = vmatmul.mubr.f32.gmra.mxu0 %v231
    %v1870 = vpop.f32.mrf.mxu0
    %v1871 = vadd.f32 %v1038, %v1870
    %v1872 = vpop.f32.mrf.mxu0
    %v1873 = vadd.f32 %v1040, %v1872
    %1874 = vmatprep.mubr.f32.mxu0 %v236
    %1875 = vmatmul.mubr.f32.gmra.mxu0 %v235
    %v1876 = vpop.f32.mrf.mxu0
    %v1877 = vadd.f32 %v1044, %v1876
    %v1878 = vpop.f32.mrf.mxu0
    %v1879 = vadd.f32 %v1046, %v1878
    %1880 = vmatprep.mubr.f32.mxu0 %v240
    %1881 = vmatmul.mubr.f32.gmra.mxu0 %v239
    %v1882 = vpop.f32.mrf.mxu0
    %v1883 = vadd.f32 %v1050, %v1882
    %v1884 = vpop.f32.mrf.mxu0
    %v1885 = vadd.f32 %v1052, %v1884
    %1886 = vmatprep.mubr.f32.mxu0 %v244
    %1887 = vmatmul.mubr.f32.gmra.mxu0 %v243
    %v1888 = vpop.f32.mrf.mxu0
    %v1889 = vadd.f32 %v1056, %v1888
    %v1890 = vpop.f32.mrf.mxu0
    %v1891 = vadd.f32 %v1058, %v1890
    %1892 = vmatprep.mubr.f32.mxu0 %v248
    %1893 = vmatmul.mubr.f32.gmra.mxu0 %v247
    %v1894 = vpop.f32.mrf.mxu0
    %v1895 = vadd.f32 %v1062, %v1894
    %v1896 = vpop.f32.mrf.mxu0
    %v1897 = vadd.f32 %v1064, %v1896
    %1898 = vmatprep.mubr.f32.mxu0 %v252
    %1899 = vmatmul.mubr.f32.gmra.mxu0 %v251
    %v1900 = vpop.f32.mrf.mxu0
    %v1901 = vadd.f32 %v1068, %v1900
    %v1902 = vpop.f32.mrf.mxu0
    %v1903 = vadd.f32 %v1070, %v1902
    %1904 = vmatprep.mubr.f32.mxu0 %v256
    %1905 = vmatmul.mubr.f32.gmra.mxu0 %v255
    %v1906 = vpop.f32.mrf.mxu0
    %v1907 = vadd.f32 %v1074, %v1906
    %v1908 = vpop.f32.mrf.mxu0
    %v1909 = vadd.f32 %v1076, %v1908
    %1910 = vmatprep.mubr.f32.mxu0 %v260
    %1911 = vmatmul.mubr.f32.gmra.mxu0 %v259
    %v1912 = vpop.f32.mrf.mxu0
    %v1913 = vadd.f32 %v1080, %v1912
    %v1914 = vpop.f32.mrf.mxu0
    %v1915 = vadd.f32 %v1082, %v1914
    %1916 = vmatprep.mubr.f32.mxu0 %v264
    %1917 = vmatmul.mubr.f32.gmra.mxu0 %v263
    %v1918 = vpop.f32.mrf.mxu0
    %v1919 = vadd.f32 %v1086, %v1918
    %v1920 = vpop.f32.mrf.mxu0
    %v1921 = vadd.f32 %v1088, %v1920
    %1922 = vmatprep.mubr.f32.mxu0 %v268
    %1923 = vmatmul.mubr.f32.gmra.mxu0 %v267
    %v1924 = vpop.f32.mrf.mxu0
    %v1925 = vadd.f32 %v1092, %v1924
    %v1926 = vpop.f32.mrf.mxu0
    %v1927 = vadd.f32 %v1094, %v1926
    %1928 = vmatprep.mubr.f32.mxu0 %v272
    %1929 = vmatmul.mubr.f32.gmra.mxu0 %v271
    %v1930 = vpop.f32.mrf.mxu0
    %v1931 = vadd.f32 %v1098, %v1930
    %v1932 = vpop.f32.mrf.mxu0
    %v1933 = vadd.f32 %v1100, %v1932
    %1934 = vmatprep.mubr.f32.mxu0 %v276
    %1935 = vmatmul.mubr.f32.gmra.mxu0 %v275
    %v1936 = vpop.f32.mrf.mxu0
    %v1937 = vadd.f32 %v1104, %v1936
    %v1938 = vpop.f32.mrf.mxu0
    %v1939 = vadd.f32 %v1106, %v1938
    %1940 = vmatprep.mubr.f32.mxu0 %v280
    %1941 = vmatmul.mubr.f32.gmra.mxu0 %v279
    %v1942 = vpop.f32.mrf.mxu0
    %v1943 = vadd.f32 %v1110, %v1942
    %v1944 = vpop.f32.mrf.mxu0
    %v1945 = vadd.f32 %v1112, %v1944
    %1946 = vmatprep.mubr.f32.mxu0 %v284
    %1947 = vmatmul.mubr.f32.gmra.mxu0 %v283
    %v1948 = vpop.f32.mrf.mxu0
    %v1949 = vadd.f32 %v1116, %v1948
    %v1950 = vpop.f32.mrf.mxu0
    %v1951 = vadd.f32 %v1118, %v1950
    %1952 = vmatprep.mubr.f32.mxu0 %v288
    %1953 = vmatmul.mubr.f32.gmra.mxu0 %v287
    %v1954 = vpop.f32.mrf.mxu0
    %v1955 = vadd.f32 %v1122, %v1954
    %v1956 = vpop.f32.mrf.mxu0
    %v1957 = vadd.f32 %v1124, %v1956
    %1958 = vmatprep.mubr.f32.mxu0 %v292
    %1959 = vmatmul.mubr.f32.gmra.mxu0 %v291
    %v1960 = vpop.f32.mrf.mxu0
    %v1961 = vadd.f32 %v1128, %v1960
    %v1962 = vpop.f32.mrf.mxu0
    %v1963 = vadd.f32 %v1130, %v1962
    %1964 = vmatprep.mubr.f32.mxu0 %v296
    %1965 = vmatmul.mubr.f32.gmra.mxu0 %v295
    %v1966 = vpop.f32.mrf.mxu0
    %v1967 = vadd.f32 %v1134, %v1966
    %v1968 = vpop.f32.mrf.mxu0
    %v1969 = vadd.f32 %v1136, %v1968
    %1970 = vmatprep.mubr.f32.mxu0 %v300
    %1971 = vmatmul.mubr.f32.gmra.mxu0 %v299
    %v1972 = vpop.f32.mrf.mxu0
    %v1973 = vadd.f32 %v1140, %v1972
    %v1974 = vpop.f32.mrf.mxu0
    %v1975 = vadd.f32 %v1142, %v1974
    %1976 = vmatprep.mubr.f32.mxu0 %v304
    %1977 = vmatmul.mubr.f32.gmra.mxu0 %v303
    %v1978 = vpop.f32.mrf.mxu0
    %v1979 = vadd.f32 %v1146, %v1978
    %v1980 = vpop.f32.mrf.mxu0
    %v1981 = vadd.f32 %v1148, %v1980
    %1982 = vmatprep.mubr.f32.mxu0 %v308
    %1983 = vmatmul.mubr.f32.gmra.mxu0 %v307
    %v1984 = vpop.f32.mrf.mxu0
    %v1985 = vadd.f32 %v1152, %v1984
    %v1986 = vpop.f32.mrf.mxu0
    %v1987 = vadd.f32 %v1154, %v1986
    %1988 = vmatprep.mubr.f32.mxu0 %v312
    %1989 = vmatmul.mubr.f32.gmra.mxu0 %v311
    %v1990 = vpop.f32.mrf.mxu0
    %v1991 = vadd.f32 %v1158, %v1990
    %v1992 = vpop.f32.mrf.mxu0
    %v1993 = vadd.f32 %v1160, %v1992
    %1994 = vmatprep.mubr.f32.mxu0 %v316
    %1995 = vmatmul.mubr.f32.gmra.mxu0 %v315
    %v1996 = vpop.f32.mrf.mxu0
    %v1997 = vadd.f32 %v1164, %v1996
    %v1998 = vpop.f32.mrf.mxu0
    %v1999 = vadd.f32 %v1166, %v1998
    %2000 = vmatprep.mubr.f32.mxu0 %v320
    %2001 = vmatmul.mubr.f32.gmra.mxu0 %v319
    %v2002 = vpop.f32.mrf.mxu0
    %v2003 = vadd.f32 %v1170, %v2002
    %v2004 = vpop.f32.mrf.mxu0
    %v2005 = vadd.f32 %v1172, %v2004
    %2006 = vmatprep.mubr.f32.mxu0 %v324
    %2007 = vmatmul.mubr.f32.gmra.mxu0 %v323
    %v2008 = vpop.f32.mrf.mxu0
    %v2009 = vadd.f32 %v1176, %v2008
    %v2010 = vpop.f32.mrf.mxu0
    %v2011 = vadd.f32 %v1178, %v2010
    %2012 = vmatprep.mubr.f32.mxu0 %v328
    %2013 = vmatmul.mubr.f32.gmra.mxu0 %v327
    %v2014 = vpop.f32.mrf.mxu0
    %v2015 = vadd.f32 %v1182, %v2014
    %v2016 = vpop.f32.mrf.mxu0
    %v2017 = vadd.f32 %v1184, %v2016
    %2018 = vmatprep.mubr.f32.mxu0 %v332
    %2019 = vmatmul.mubr.f32.gmra.mxu0 %v331
    %v2020 = vpop.f32.mrf.mxu0
    %v2021 = vadd.f32 %v1188, %v2020
    %v2022 = vpop.f32.mrf.mxu0
    %v2023 = vadd.f32 %v1190, %v2022
    %2024 = vmatprep.mubr.f32.mxu0 %v336
    %2025 = vmatmul.mubr.f32.gmra.mxu0 %v335
    %v2026 = vpop.f32.mrf.mxu0
    %v2027 = vadd.f32 %v1194, %v2026
    %v2028 = vpop.f32.mrf.mxu0
    %v2029 = vadd.f32 %v1196, %v2028
    %2030 = vmatprep.mubr.f32.mxu0 %v340
    %2031 = vmatmul.mubr.f32.gmra.mxu0 %v339
    %v2032 = vpop.f32.mrf.mxu0
    %v2033 = vadd.f32 %v1200, %v2032
    %v2034 = vpop.f32.mrf.mxu0
    %v2035 = vadd.f32 %v1202, %v2034
    %2036 = vmatprep.mubr.f32.mxu0 %v344
    %2037 = vmatmul.mubr.f32.gmra.mxu0 %v343
    %v2038 = vpop.f32.mrf.mxu0
    %v2039 = vadd.f32 %v1206, %v2038
    %v2040 = vpop.f32.mrf.mxu0
    %v2041 = vadd.f32 %v1208, %v2040
    %2042 = vmatprep.mubr.f32.mxu0 %v348
    %2043 = vmatmul.mubr.f32.gmra.mxu0 %v347
    %v2044 = vpop.f32.mrf.mxu0
    %v2045 = vadd.f32 %v1212, %v2044
    %v2046 = vpop.f32.mrf.mxu0
    %v2047 = vadd.f32 %v1214, %v2046
    %2048 = vmatprep.mubr.f32.mxu0 %v352
    %2049 = vmatmul.mubr.f32.gmra.mxu0 %v351
    %v2050 = vpop.f32.mrf.mxu0
    %v2051 = vadd.f32 %v1218, %v2050
    %v2052 = vpop.f32.mrf.mxu0
    %v2053 = vadd.f32 %v1220, %v2052
    %2054 = vmatprep.mubr.f32.mxu0 %v356
    %2055 = vmatmul.mubr.f32.gmra.mxu0 %v355
    %v2056 = vpop.f32.mrf.mxu0
    %v2057 = vadd.f32 %v1224, %v2056
    %v2058 = vpop.f32.mrf.mxu0
    %v2059 = vadd.f32 %v1226, %v2058
    %2060 = vmatprep.mubr.f32.mxu0 %v360
    %2061 = vmatmul.mubr.f32.gmra.mxu0 %v359
    %v2062 = vpop.f32.mrf.mxu0
    %v2063 = vadd.f32 %v1230, %v2062
    %v2064 = vpop.f32.mrf.mxu0
    %v2065 = vadd.f32 %v1232, %v2064
    %2066 = vmatprep.mubr.f32.mxu0 %v364
    %2067 = vmatmul.mubr.f32.gmra.mxu0 %v363
    %v2068 = vpop.f32.mrf.mxu0
    %v2069 = vadd.f32 %v1236, %v2068
    %v2070 = vpop.f32.mrf.mxu0
    %v2071 = vadd.f32 %v1238, %v2070
    %2072 = vmatprep.mubr.f32.mxu0 %v368
    %2073 = vmatmul.mubr.f32.gmra.mxu0 %v367
    %v2074 = vpop.f32.mrf.mxu0
    %v2075 = vadd.f32 %v1242, %v2074
    %v2076 = vpop.f32.mrf.mxu0
    %v2077 = vadd.f32 %v1244, %v2076
    %2078 = vmatprep.mubr.f32.mxu0 %v372
    %2079 = vmatmul.mubr.f32.gmra.mxu0 %v371
    %v2080 = vpop.f32.mrf.mxu0
    %v2081 = vadd.f32 %v1248, %v2080
    %v2082 = vpop.f32.mrf.mxu0
    %v2083 = vadd.f32 %v1250, %v2082
    %2084 = vmatprep.mubr.f32.mxu0 %v376
    %2085 = vmatmul.mubr.f32.gmra.mxu0 %v375
    %v2086 = vpop.f32.mrf.mxu0
    %v2087 = vadd.f32 %v1254, %v2086
    %v2088 = vpop.f32.mrf.mxu0
    %v2089 = vadd.f32 %v1256, %v2088
    %2090 = vmatprep.mubr.f32.mxu0 %v380
    %2091 = vmatmul.mubr.f32.gmra.mxu0 %v379
    %v2092 = vpop.f32.mrf.mxu0
    %v2093 = vadd.f32 %v1260, %v2092
    %v2094 = vpop.f32.mrf.mxu0
    %v2095 = vadd.f32 %v1262, %v2094
    %2096 = vmatprep.mubr.f32.mxu0 %v384
    %2097 = vmatmul.mubr.f32.gmra.mxu0 %v383
    %v2098 = vpop.f32.mrf.mxu0
    %v2099 = vadd.f32 %v1266, %v2098
    %v2100 = vpop.f32.mrf.mxu0
    %v2101 = vadd.f32 %v1268, %v2100
    %2102 = vmatprep.mubr.f32.mxu0 %v388
    %2103 = vmatmul.mubr.f32.gmra.mxu0 %v387
    %v2104 = vpop.f32.mrf.mxu0
    %v2105 = vadd.f32 %v1272, %v2104
    %v2106 = vpop.f32.mrf.mxu0
    %v2107 = vadd.f32 %v1274, %v2106
    %2108 = vmatprep.mubr.f32.mxu0 %v392
    %2109 = vmatmul.mubr.f32.gmra.mxu0 %v391
    %v2110 = vpop.f32.mrf.mxu0
    %v2111 = vadd.f32 %v1278, %v2110
    %v2112 = vpop.f32.mrf.mxu0
    %v2113 = vadd.f32 %v1280, %v2112
    %2114 = vmatprep.mubr.f32.mxu0 %v396
    %2115 = vmatmul.mubr.f32.gmra.mxu0 %v395
    %v2116 = vpop.f32.mrf.mxu0
    %v2117 = vadd.f32 %v1284, %v2116
    %v2118 = vpop.f32.mrf.mxu0
    %v2119 = vadd.f32 %v1286, %v2118
    %2120 = vmatprep.mubr.f32.mxu0 %v400
    %2121 = vmatmul.mubr.f32.gmra.mxu0 %v399
    %v2122 = vpop.f32.mrf.mxu0
    %v2123 = vadd.f32 %v1290, %v2122
    %v2124 = vpop.f32.mrf.mxu0
    %v2125 = vadd.f32 %v1292, %v2124
    %2126 = vmatprep.mubr.f32.mxu0 %v404
    %2127 = vmatmul.mubr.f32.gmra.mxu0 %v403
    %v2128 = vpop.f32.mrf.mxu0
    %v2129 = vadd.f32 %v1296, %v2128
    %v2130 = vpop.f32.mrf.mxu0
    %v2131 = vadd.f32 %v1298, %v2130
    %2132 = vmatprep.mubr.f32.mxu0 %v408
    %2133 = vmatmul.mubr.f32.gmra.mxu0 %v407
    %v2134 = vpop.f32.mrf.mxu0
    %v2135 = vadd.f32 %v1302, %v2134
    %v2136 = vpop.f32.mrf.mxu0
    %v2137 = vadd.f32 %v1304, %v2136
    %2138 = vmatprep.mubr.f32.mxu0 %v412
    %2139 = vmatmul.mubr.f32.gmra.mxu0 %v411
    %v2140 = vpop.f32.mrf.mxu0
    %v2141 = vadd.f32 %v1308, %v2140
    %v2142 = vpop.f32.mrf.mxu0
    %v2143 = vadd.f32 %v1310, %v2142
    %2144 = vmatprep.mubr.f32.mxu0 %v416
    %2145 = vmatmul.mubr.f32.gmra.mxu0 %v415
    %v2146 = vpop.f32.mrf.mxu0
    %v2147 = vadd.f32 %v1314, %v2146
    %v2148 = vpop.f32.mrf.mxu0
    %v2149 = vadd.f32 %v1316, %v2148
    %2150 = vmatprep.mubr.f32.mxu0 %v420
    %2151 = vmatmul.mubr.f32.gmra.mxu0 %v419
    %v2152 = vpop.f32.mrf.mxu0
    %v2153 = vadd.f32 %v1320, %v2152
    %v2154 = vpop.f32.mrf.mxu0
    %v2155 = vadd.f32 %v1322, %v2154
    %2156 = vmatprep.mubr.f32.mxu0 %v424
    %2157 = vmatmul.mubr.f32.gmra.mxu0 %v423
    %v2158 = vpop.f32.mrf.mxu0
    %v2159 = vadd.f32 %v1326, %v2158
    %v2160 = vpop.f32.mrf.mxu0
    %v2161 = vadd.f32 %v1328, %v2160
    %2162 = vmatprep.mubr.f32.mxu0 %v428
    %2163 = vmatmul.mubr.f32.gmra.mxu0 %v427
    %v2164 = vpop.f32.mrf.mxu0
    %v2165 = vadd.f32 %v1332, %v2164
    %v2166 = vpop.f32.mrf.mxu0
    %v2167 = vadd.f32 %v1334, %v2166
    %2168 = vmatprep.mubr.f32.mxu0 %v432
    %2169 = vmatmul.mubr.f32.gmra.mxu0 %v431
    %v2170 = vpop.f32.mrf.mxu0
    %v2171 = vadd.f32 %v1338, %v2170
    %v2172 = vpop.f32.mrf.mxu0
    %v2173 = vadd.f32 %v1340, %v2172
    %2174 = vmatprep.mubr.f32.mxu0 %v436
    %2175 = vmatmul.mubr.f32.gmra.mxu0 %v435
    %v2176 = vpop.f32.mrf.mxu0
    %v2177 = vadd.f32 %v1344, %v2176
    %v2178 = vpop.f32.mrf.mxu0
    %v2179 = vadd.f32 %v1346, %v2178
    %2180 = vmatprep.mubr.f32.mxu0 %v440
    %2181 = vmatmul.mubr.f32.gmra.mxu0 %v439
    %v2182 = vpop.f32.mrf.mxu0
    %v2183 = vadd.f32 %v1350, %v2182
    %v2184 = vpop.f32.mrf.mxu0
    %v2185 = vadd.f32 %v1352, %v2184
    %2186 = vmatprep.mubr.f32.mxu0 %v444
    %2187 = vmatmul.mubr.f32.gmra.mxu0 %v443
    %v2188 = vpop.f32.mrf.mxu0
    %v2189 = vadd.f32 %v1356, %v2188
    %v2190 = vpop.f32.mrf.mxu0
    %v2191 = vadd.f32 %v1358, %v2190
    %2192 = vmatprep.mubr.f32.mxu0 %v448
    %2193 = vmatmul.mubr.f32.gmra.mxu0 %v447
    %v2194 = vpop.f32.mrf.mxu0
    %v2195 = vadd.f32 %v1362, %v2194
    %v2196 = vpop.f32.mrf.mxu0
    %v2197 = vadd.f32 %v1364, %v2196
    %2198 = vmatprep.mubr.f32.mxu0 %v452
    %2199 = vmatmul.mubr.f32.gmra.mxu0 %v451
    %v2200 = vpop.f32.mrf.mxu0
    %v2201 = vadd.f32 %v1368, %v2200
    %v2202 = vpop.f32.mrf.mxu0
    %v2203 = vadd.f32 %v1370, %v2202
    %2204 = vmatprep.mubr.f32.mxu0 %v456
    %2205 = vmatmul.mubr.f32.gmra.mxu0 %v455
    %v2206 = vpop.f32.mrf.mxu0
    %v2207 = vadd.f32 %v1374, %v2206
    %v2208 = vpop.f32.mrf.mxu0
    %v2209 = vadd.f32 %v1376, %v2208
    %2210 = vmatprep.mubr.f32.mxu0 %v460
    %2211 = vmatmul.mubr.f32.gmra.mxu0 %v459
    %v2212 = vpop.f32.mrf.mxu0
    %v2213 = vadd.f32 %v1380, %v2212
    %v2214 = vpop.f32.mrf.mxu0
    %v2215 = vadd.f32 %v1382, %v2214
    %2216 = vmatprep.mubr.f32.mxu0 %v464
    %2217 = vmatmul.mubr.f32.gmra.mxu0 %v463
    %v2218 = vpop.f32.mrf.mxu0
    %v2219 = vadd.f32 %v1386, %v2218
    %v2220 = vpop.f32.mrf.mxu0
    %v2221 = vadd.f32 %v1388, %v2220
    %2222 = vmatprep.mubr.f32.mxu0 %v468
    %2223 = vmatmul.mubr.f32.gmra.mxu0 %v467
    %v2224 = vpop.f32.mrf.mxu0
    %v2225 = vadd.f32 %v1392, %v2224
    %v2226 = vpop.f32.mrf.mxu0
    %v2227 = vadd.f32 %v1394, %v2226
    %2228 = vmatprep.mubr.f32.mxu0 %v472
    %2229 = vmatmul.mubr.f32.gmra.mxu0 %v471
    %v2230 = vpop.f32.mrf.mxu0
    %v2231 = vadd.f32 %v1398, %v2230
    %v2232 = vpop.f32.mrf.mxu0
    %v2233 = vadd.f32 %v1400, %v2232
    %2234 = vmatprep.mubr.f32.mxu0 %v476
    %2235 = vmatmul.mubr.f32.gmra.mxu0 %v475
    %v2236 = vpop.f32.mrf.mxu0
    %v2237 = vadd.f32 %v1404, %v2236
    %v2238 = vpop.f32.mrf.mxu0
    %v2239 = vadd.f32 %v1406, %v2238
    %2240 = vmatprep.mubr.f32.mxu0 %v480
    %2241 = vmatmul.mubr.f32.gmra.mxu0 %v479
    %v2242 = vpop.f32.mrf.mxu0
    %v2243 = vadd.f32 %v1410, %v2242
    %v2244 = vpop.f32.mrf.mxu0
    %v2245 = vadd.f32 %v1412, %v2244
    %2246 = vmatprep.mubr.f32.mxu0 %v484
    %2247 = vmatmul.mubr.f32.gmra.mxu0 %v483
    %v2248 = vpop.f32.mrf.mxu0
    %v2249 = vadd.f32 %v1416, %v2248
    %v2250 = vpop.f32.mrf.mxu0
    %v2251 = vadd.f32 %v1418, %v2250
    %2252 = vmatprep.mubr.f32.mxu0 %v488
    %2253 = vmatmul.mubr.f32.gmra.mxu0 %v487
    %v2254 = vpop.f32.mrf.mxu0
    %v2255 = vadd.f32 %v1422, %v2254
    %v2256 = vpop.f32.mrf.mxu0
    %v2257 = vadd.f32 %v1424, %v2256
    %2258 = vmatprep.mubr.f32.mxu0 %v492
    %2259 = vmatmul.mubr.f32.gmra.mxu0 %v491
    %v2260 = vpop.f32.mrf.mxu0
    %v2261 = vadd.f32 %v1428, %v2260
    %v2262 = vpop.f32.mrf.mxu0
    %v2263 = vadd.f32 %v1430, %v2262
    %2264 = vmatprep.mubr.f32.mxu0 %v496
    %2265 = vmatmul.mubr.f32.gmra.mxu0 %v495
    %v2266 = vpop.f32.mrf.mxu0
    %v2267 = vadd.f32 %v1434, %v2266
    %v2268 = vpop.f32.mrf.mxu0
    %v2269 = vadd.f32 %v1436, %v2268
    %2270 = vmatprep.mubr.f32.mxu0 %v500
    %2271 = vmatmul.mubr.f32.gmra.mxu0 %v499
    %v2272 = vpop.f32.mrf.mxu0
    %v2273 = vadd.f32 %v1440, %v2272
    %v2274 = vpop.f32.mrf.mxu0
    %v2275 = vadd.f32 %v1442, %v2274
    %2276 = vmatprep.mubr.f32.mxu0 %v504
    %2277 = vmatmul.mubr.f32.gmra.mxu0 %v503
    %v2278 = vpop.f32.mrf.mxu0
    %v2279 = vadd.f32 %v1446, %v2278
    %v2280 = vpop.f32.mrf.mxu0
    %v2281 = vadd.f32 %v1448, %v2280
    %2282 = vmatprep.mubr.f32.mxu0 %v508
    %2283 = vmatmul.mubr.f32.gmra.mxu0 %v507
    %v2284 = vpop.f32.mrf.mxu0
    %v2285 = vadd.f32 %v1452, %v2284
    %v2286 = vpop.f32.mrf.mxu0
    %v2287 = vadd.f32 %v1454, %v2286
    %2288 = vmatprep.mubr.f32.mxu0 %v512
    %2289 = vmatmul.mubr.f32.gmra.mxu0 %v511
    %v2290 = vpop.f32.mrf.mxu0
    %v2291 = vadd.f32 %v1458, %v2290
    %v2292 = vpop.f32.mrf.mxu0
    %v2293 = vadd.f32 %v1460, %v2292
    %2294 = vmatprep.mubr.f32.mxu0 %v516
    %2295 = vmatmul.mubr.f32.gmra.mxu0 %v515
    %v2296 = vpop.f32.mrf.mxu0
    %v2297 = vadd.f32 %v1464, %v2296
    %v2298 = vpop.f32.mrf.mxu0
    %v2299 = vadd.f32 %v1466, %v2298
    %2300 = vmatprep.mubr.f32.mxu0 %v520
    %2301 = vmatmul.mubr.f32.gmra.mxu0 %v519
    %v2302 = vpop.f32.mrf.mxu0
    %v2303 = vadd.f32 %v1470, %v2302
    %v2304 = vpop.f32.mrf.mxu0
    %v2305 = vadd.f32 %v1472, %v2304
    %2306 = vmatprep.mubr.f32.mxu0 %v524
    %2307 = vmatmul.mubr.f32.gmra.mxu0 %v523
    %v2308 = vpop.f32.mrf.mxu0
    %v2309 = vadd.f32 %v1476, %v2308
    %v2310 = vpop.f32.mrf.mxu0
    %v2311 = vadd.f32 %v1478, %v2310
    %2312 = vmatprep.mubr.f32.mxu0 %v528
    %2313 = vmatmul.mubr.f32.gmra.mxu0 %v527
    %v2314 = vpop.f32.mrf.mxu0
    %v2315 = vadd.f32 %v1482, %v2314
    %v2316 = vpop.f32.mrf.mxu0
    %v2317 = vadd.f32 %v1484, %v2316
    %2318 = vmatprep.mubr.f32.mxu0 %v532
    %2319 = vmatmul.mubr.f32.gmra.mxu0 %v531
    %v2320 = vpop.f32.mrf.mxu0
    %v2321 = vadd.f32 %v1488, %v2320
    %v2322 = vpop.f32.mrf.mxu0
    %v2323 = vadd.f32 %v1490, %v2322
    %2324 = vmatprep.mubr.f32.mxu0 %v536
    %2325 = vmatmul.mubr.f32.gmra.mxu0 %v535
    %v2326 = vpop.f32.mrf.mxu0
    %v2327 = vadd.f32 %v1494, %v2326
    %v2328 = vpop.f32.mrf.mxu0
    %v2329 = vadd.f32 %v1496, %v2328
    %2330 = vdwg.mxu0
    %2331 = vst [vmem:[%s2] sm:$0xff] %v1565
    %vm2332 = vcmask 556032
    %2333 = vst.msk [vmem:[%s2 + $0x8] sm:$0xff] %vm2332, %v1567
    %2334 = vst [vmem:[%s2 + $0x10] sm:$0xff] %v1571
    %2335 = vst.msk [vmem:[%s2 + $0x18] sm:$0xff] %vm2332, %v1573
    %2336 = vst [vmem:[%s2 + $0x20] sm:$0xff] %v1577
    %2337 = vst.msk [vmem:[%s2 + $0x28] sm:$0xff] %vm2332, %v1579
    %2338 = vst [vmem:[%s2 + $0x30] sm:$0xff] %v1583
    %2339 = vst.msk [vmem:[%s2 + $0x38] sm:$0xff] %vm2332, %v1585
    %2340 = vst [vmem:[%s2 + $0x40] sm:$0xff] %v1589
    %2341 = vst.msk [vmem:[%s2 + $0x48] sm:$0xff] %vm2332, %v1591
    %2342 = vst [vmem:[%s2 + $0x50] sm:$0xff] %v1595
    %2343 = vst.msk [vmem:[%s2 + $0x58] sm:$0xff] %vm2332, %v1597
    %2344 = vst [vmem:[%s2 + $0x60] sm:$0xff] %v1601
    %2345 = vst.msk [vmem:[%s2 + $0x68] sm:$0xff] %vm2332, %v1603
    %2346 = vst [vmem:[%s2 + $0x70] sm:$0xff] %v1607
    %2347 = vst.msk [vmem:[%s2 + $0x78] sm:$0xff] %vm2332, %v1609
    %2348 = vst [vmem:[%s2 + $0x80] sm:$0xff] %v1613
    %2349 = vst.msk [vmem:[%s2 + $0x88] sm:$0xff] %vm2332, %v1615
    %2350 = vst [vmem:[%s2 + $0x90] sm:$0xff] %v1619
    %2351 = vst.msk [vmem:[%s2 + $0x98] sm:$0xff] %vm2332, %v1621
    %2352 = vst [vmem:[%s2 + $0xa0] sm:$0xff] %v1625
    %2353 = vst.msk [vmem:[%s2 + $0xa8] sm:$0xff] %vm2332, %v1627
    %2354 = vst [vmem:[%s2 + $0xb0] sm:$0xff] %v1631
    %2355 = vst.msk [vmem:[%s2 + $0xb8] sm:$0xff] %vm2332, %v1633
    %2356 = vst [vmem:[%s2 + $0xc0] sm:$0xff] %v1637
    %2357 = vst.msk [vmem:[%s2 + $0xc8] sm:$0xff] %vm2332, %v1639
    %2358 = vst [vmem:[%s2 + $0xd0] sm:$0xff] %v1643
    %2359 = vst.msk [vmem:[%s2 + $0xd8] sm:$0xff] %vm2332, %v1645
    %2360 = vst [vmem:[%s2 + $0xe0] sm:$0xff] %v1649
    %2361 = vst.msk [vmem:[%s2 + $0xe8] sm:$0xff] %vm2332, %v1651
    %2362 = vst [vmem:[%s2 + $0xf0] sm:$0xff] %v1655
    %2363 = vst.msk [vmem:[%s2 + $0xf8] sm:$0xff] %vm2332, %v1657
    %2364 = vst [vmem:[%s2 + $0x100] sm:$0xff] %v1661
    %2365 = vst.msk [vmem:[%s2 + $0x108] sm:$0xff] %vm2332, %v1663
    %2366 = vst [vmem:[%s2 + $0x110] sm:$0xff] %v1667
    %2367 = vst.msk [vmem:[%s2 + $0x118] sm:$0xff] %vm2332, %v1669
    %2368 = vst [vmem:[%s2 + $0x120] sm:$0xff] %v1673
    %2369 = vst.msk [vmem:[%s2 + $0x128] sm:$0xff] %vm2332, %v1675
    %2370 = vst [vmem:[%s2 + $0x130] sm:$0xff] %v1679
    %2371 = vst.msk [vmem:[%s2 + $0x138] sm:$0xff] %vm2332, %v1681
    %2372 = vst [vmem:[%s2 + $0x140] sm:$0xff] %v1685
    %2373 = vst.msk [vmem:[%s2 + $0x148] sm:$0xff] %vm2332, %v1687
    %2374 = vst [vmem:[%s2 + $0x150] sm:$0xff] %v1691
    %2375 = vst.msk [vmem:[%s2 + $0x158] sm:$0xff] %vm2332, %v1693
    %2376 = vst [vmem:[%s2 + $0x160] sm:$0xff] %v1697
    %2377 = vst.msk [vmem:[%s2 + $0x168] sm:$0xff] %vm2332, %v1699
    %2378 = vst [vmem:[%s2 + $0x170] sm:$0xff] %v1703
    %2379 = vst.msk [vmem:[%s2 + $0x178] sm:$0xff] %vm2332, %v1705
    %2380 = vst [vmem:[%s2 + $0x180] sm:$0xff] %v1709
    %2381 = vst.msk [vmem:[%s2 + $0x188] sm:$0xff] %vm2332, %v1711
    %2382 = vst [vmem:[%s2 + $0x190] sm:$0xff] %v1715
    %2383 = vst.msk [vmem:[%s2 + $0x198] sm:$0xff] %vm2332, %v1717
    %2384 = vst [vmem:[%s2 + $0x1a0] sm:$0xff] %v1721
    %2385 = vst.msk [vmem:[%s2 + $0x1a8] sm:$0xff] %vm2332, %v1723
    %2386 = vst [vmem:[%s2 + $0x1b0] sm:$0xff] %v1727
    %2387 = vst.msk [vmem:[%s2 + $0x1b8] sm:$0xff] %vm2332, %v1729
    %2388 = vst [vmem:[%s2 + $0x1c0] sm:$0xff] %v1733
    %2389 = vst.msk [vmem:[%s2 + $0x1c8] sm:$0xff] %vm2332, %v1735
    %2390 = vst [vmem:[%s2 + $0x1d0] sm:$0xff] %v1739
    %2391 = vst.msk [vmem:[%s2 + $0x1d8] sm:$0xff] %vm2332, %v1741
    %2392 = vst [vmem:[%s2 + $0x1e0] sm:$0xff] %v1745
    %2393 = vst.msk [vmem:[%s2 + $0x1e8] sm:$0xff] %vm2332, %v1747
    %2394 = vst [vmem:[%s2 + $0x1f0] sm:$0xff] %v1751
    %2395 = vst.msk [vmem:[%s2 + $0x1f8] sm:$0xff] %vm2332, %v1753
    %2396 = vst [vmem:[%s2 + $0x200] sm:$0xff] %v1757
    %2397 = vst.msk [vmem:[%s2 + $0x208] sm:$0xff] %vm2332, %v1759
    %2398 = vst [vmem:[%s2 + $0x210] sm:$0xff] %v1763
    %2399 = vst.msk [vmem:[%s2 + $0x218] sm:$0xff] %vm2332, %v1765
    %2400 = vst [vmem:[%s2 + $0x220] sm:$0xff] %v1769
    %2401 = vst.msk [vmem:[%s2 + $0x228] sm:$0xff] %vm2332, %v1771
    %2402 = vst [vmem:[%s2 + $0x230] sm:$0xff] %v1775
    %2403 = vst.msk [vmem:[%s2 + $0x238] sm:$0xff] %vm2332, %v1777
    %2404 = vst [vmem:[%s2 + $0x240] sm:$0xff] %v1781
    %2405 = vst.msk [vmem:[%s2 + $0x248] sm:$0xff] %vm2332, %v1783
    %2406 = vst [vmem:[%s2 + $0x250] sm:$0xff] %v1787
    %2407 = vst.msk [vmem:[%s2 + $0x258] sm:$0xff] %vm2332, %v1789
    %2408 = vst [vmem:[%s2 + $0x260] sm:$0xff] %v1793
    %2409 = vst.msk [vmem:[%s2 + $0x268] sm:$0xff] %vm2332, %v1795
    %2410 = vst [vmem:[%s2 + $0x270] sm:$0xff] %v1799
    %2411 = vst.msk [vmem:[%s2 + $0x278] sm:$0xff] %vm2332, %v1801
    %2412 = vst [vmem:[%s2 + $0x280] sm:$0xff] %v1805
    %2413 = vst.msk [vmem:[%s2 + $0x288] sm:$0xff] %vm2332, %v1807
    %2414 = vst [vmem:[%s2 + $0x290] sm:$0xff] %v1811
    %2415 = vst.msk [vmem:[%s2 + $0x298] sm:$0xff] %vm2332, %v1813
    %2416 = vst [vmem:[%s2 + $0x2a0] sm:$0xff] %v1817
    %2417 = vst.msk [vmem:[%s2 + $0x2a8] sm:$0xff] %vm2332, %v1819
    %2418 = vst [vmem:[%s2 + $0x2b0] sm:$0xff] %v1823
    %2419 = vst.msk [vmem:[%s2 + $0x2b8] sm:$0xff] %vm2332, %v1825
    %2420 = vst [vmem:[%s2 + $0x2c0] sm:$0xff] %v1829
    %2421 = vst.msk [vmem:[%s2 + $0x2c8] sm:$0xff] %vm2332, %v1831
    %2422 = vst [vmem:[%s2 + $0x2d0] sm:$0xff] %v1835
    %2423 = vst.msk [vmem:[%s2 + $0x2d8] sm:$0xff] %vm2332, %v1837
    %2424 = vst [vmem:[%s2 + $0x2e0] sm:$0xff] %v1841
    %2425 = vst.msk [vmem:[%s2 + $0x2e8] sm:$0xff] %vm2332, %v1843
    %2426 = vst [vmem:[%s2 + $0x2f0] sm:$0xff] %v1847
    %2427 = vst.msk [vmem:[%s2 + $0x2f8] sm:$0xff] %vm2332, %v1849
    %2428 = vst [vmem:[%s2 + $0x300] sm:$0xff] %v1853
    %2429 = vst.msk [vmem:[%s2 + $0x308] sm:$0xff] %vm2332, %v1855
    %2430 = vst [vmem:[%s2 + $0x310] sm:$0xff] %v1859
    %2431 = vst.msk [vmem:[%s2 + $0x318] sm:$0xff] %vm2332, %v1861
    %2432 = vst [vmem:[%s2 + $0x320] sm:$0xff] %v1865
    %2433 = vst.msk [vmem:[%s2 + $0x328] sm:$0xff] %vm2332, %v1867
    %2434 = vst [vmem:[%s2 + $0x330] sm:$0xff] %v1871
    %2435 = vst.msk [vmem:[%s2 + $0x338] sm:$0xff] %vm2332, %v1873
    %2436 = vst [vmem:[%s2 + $0x340] sm:$0xff] %v1877
    %2437 = vst.msk [vmem:[%s2 + $0x348] sm:$0xff] %vm2332, %v1879
    %2438 = vst [vmem:[%s2 + $0x350] sm:$0xff] %v1883
    %2439 = vst.msk [vmem:[%s2 + $0x358] sm:$0xff] %vm2332, %v1885
    %2440 = vst [vmem:[%s2 + $0x360] sm:$0xff] %v1889
    %2441 = vst.msk [vmem:[%s2 + $0x368] sm:$0xff] %vm2332, %v1891
    %2442 = vst [vmem:[%s2 + $0x370] sm:$0xff] %v1895
    %2443 = vst.msk [vmem:[%s2 + $0x378] sm:$0xff] %vm2332, %v1897
    %2444 = vst [vmem:[%s2 + $0x380] sm:$0xff] %v1901
    %2445 = vst.msk [vmem:[%s2 + $0x388] sm:$0xff] %vm2332, %v1903
    %2446 = vst [vmem:[%s2 + $0x390] sm:$0xff] %v1907
    %2447 = vst.msk [vmem:[%s2 + $0x398] sm:$0xff] %vm2332, %v1909
    %2448 = vst [vmem:[%s2 + $0x3a0] sm:$0xff] %v1913
    %2449 = vst.msk [vmem:[%s2 + $0x3a8] sm:$0xff] %vm2332, %v1915
    %2450 = vst [vmem:[%s2 + $0x3b0] sm:$0xff] %v1919
    %2451 = vst.msk [vmem:[%s2 + $0x3b8] sm:$0xff] %vm2332, %v1921
    %2452 = vst [vmem:[%s2 + $0x3c0] sm:$0xff] %v1925
    %2453 = vst.msk [vmem:[%s2 + $0x3c8] sm:$0xff] %vm2332, %v1927
    %2454 = vst [vmem:[%s2 + $0x3d0] sm:$0xff] %v1931
    %2455 = vst.msk [vmem:[%s2 + $0x3d8] sm:$0xff] %vm2332, %v1933
    %2456 = vst [vmem:[%s2 + $0x3e0] sm:$0xff] %v1937
    %2457 = vst.msk [vmem:[%s2 + $0x3e8] sm:$0xff] %vm2332, %v1939
    %2458 = vst [vmem:[%s2 + $0x3f0] sm:$0xff] %v1943
    %2459 = vst.msk [vmem:[%s2 + $0x3f8] sm:$0xff] %vm2332, %v1945
    %2460 = vst [vmem:[%s2 + $0x400] sm:$0xff] %v1949
    %2461 = vst.msk [vmem:[%s2 + $0x408] sm:$0xff] %vm2332, %v1951
    %2462 = vst [vmem:[%s2 + $0x410] sm:$0xff] %v1955
    %2463 = vst.msk [vmem:[%s2 + $0x418] sm:$0xff] %vm2332, %v1957
    %2464 = vst [vmem:[%s2 + $0x420] sm:$0xff] %v1961
    %2465 = vst.msk [vmem:[%s2 + $0x428] sm:$0xff] %vm2332, %v1963
    %2466 = vst [vmem:[%s2 + $0x430] sm:$0xff] %v1967
    %2467 = vst.msk [vmem:[%s2 + $0x438] sm:$0xff] %vm2332, %v1969
    %2468 = vst [vmem:[%s2 + $0x440] sm:$0xff] %v1973
    %2469 = vst.msk [vmem:[%s2 + $0x448] sm:$0xff] %vm2332, %v1975
    %2470 = vst [vmem:[%s2 + $0x450] sm:$0xff] %v1979
    %2471 = vst.msk [vmem:[%s2 + $0x458] sm:$0xff] %vm2332, %v1981
    %2472 = vst [vmem:[%s2 + $0x460] sm:$0xff] %v1985
    %2473 = vst.msk [vmem:[%s2 + $0x468] sm:$0xff] %vm2332, %v1987
    %2474 = vst [vmem:[%s2 + $0x470] sm:$0xff] %v1991
    %2475 = vst.msk [vmem:[%s2 + $0x478] sm:$0xff] %vm2332, %v1993
    %2476 = vst [vmem:[%s2 + $0x480] sm:$0xff] %v1997
    %2477 = vst.msk [vmem:[%s2 + $0x488] sm:$0xff] %vm2332, %v1999
    %2478 = vst [vmem:[%s2 + $0x490] sm:$0xff] %v2003
    %2479 = vst.msk [vmem:[%s2 + $0x498] sm:$0xff] %vm2332, %v2005
    %2480 = vst [vmem:[%s2 + $0x4a0] sm:$0xff] %v2009
    %2481 = vst.msk [vmem:[%s2 + $0x4a8] sm:$0xff] %vm2332, %v2011
    %2482 = vst [vmem:[%s2 + $0x4b0] sm:$0xff] %v2015
    %2483 = vst.msk [vmem:[%s2 + $0x4b8] sm:$0xff] %vm2332, %v2017
    %2484 = vst [vmem:[%s2 + $0x4c0] sm:$0xff] %v2021
    %2485 = vst.msk [vmem:[%s2 + $0x4c8] sm:$0xff] %vm2332, %v2023
    %2486 = vst [vmem:[%s2 + $0x4d0] sm:$0xff] %v2027
    %2487 = vst.msk [vmem:[%s2 + $0x4d8] sm:$0xff] %vm2332, %v2029
    %2488 = vst [vmem:[%s2 + $0x4e0] sm:$0xff] %v2033
    %2489 = vst.msk [vmem:[%s2 + $0x4e8] sm:$0xff] %vm2332, %v2035
    %2490 = vst [vmem:[%s2 + $0x4f0] sm:$0xff] %v2039
    %2491 = vst.msk [vmem:[%s2 + $0x4f8] sm:$0xff] %vm2332, %v2041
    %2492 = vst [vmem:[%s2 + $0x500] sm:$0xff] %v2045
    %2493 = vst.msk [vmem:[%s2 + $0x508] sm:$0xff] %vm2332, %v2047
    %2494 = vst [vmem:[%s2 + $0x510] sm:$0xff] %v2051
    %2495 = vst.msk [vmem:[%s2 + $0x518] sm:$0xff] %vm2332, %v2053
    %2496 = vst [vmem:[%s2 + $0x520] sm:$0xff] %v2057
    %2497 = vst.msk [vmem:[%s2 + $0x528] sm:$0xff] %vm2332, %v2059
    %2498 = vst [vmem:[%s2 + $0x530] sm:$0xff] %v2063
    %2499 = vst.msk [vmem:[%s2 + $0x538] sm:$0xff] %vm2332, %v2065
    %2500 = vst [vmem:[%s2 + $0x540] sm:$0xff] %v2069
    %2501 = vst.msk [vmem:[%s2 + $0x548] sm:$0xff] %vm2332, %v2071
    %2502 = vst [vmem:[%s2 + $0x550] sm:$0xff] %v2075
    %2503 = vst.msk [vmem:[%s2 + $0x558] sm:$0xff] %vm2332, %v2077
    %2504 = vst [vmem:[%s2 + $0x560] sm:$0xff] %v2081
    %2505 = vst.msk [vmem:[%s2 + $0x568] sm:$0xff] %vm2332, %v2083
    %2506 = vst [vmem:[%s2 + $0x570] sm:$0xff] %v2087
    %2507 = vst.msk [vmem:[%s2 + $0x578] sm:$0xff] %vm2332, %v2089
    %2508 = vst [vmem:[%s2 + $0x580] sm:$0xff] %v2093
    %2509 = vst.msk [vmem:[%s2 + $0x588] sm:$0xff] %vm2332, %v2095
    %2510 = vst [vmem:[%s2 + $0x590] sm:$0xff] %v2099
    %2511 = vst.msk [vmem:[%s2 + $0x598] sm:$0xff] %vm2332, %v2101
    %2512 = vst [vmem:[%s2 + $0x5a0] sm:$0xff] %v2105
    %2513 = vst.msk [vmem:[%s2 + $0x5a8] sm:$0xff] %vm2332, %v2107
    %2514 = vst [vmem:[%s2 + $0x5b0] sm:$0xff] %v2111
    %2515 = vst.msk [vmem:[%s2 + $0x5b8] sm:$0xff] %vm2332, %v2113
    %2516 = vst [vmem:[%s2 + $0x5c0] sm:$0xff] %v2117
    %2517 = vst.msk [vmem:[%s2 + $0x5c8] sm:$0xff] %vm2332, %v2119
    %2518 = vst [vmem:[%s2 + $0x5d0] sm:$0xff] %v2123
    %2519 = vst.msk [vmem:[%s2 + $0x5d8] sm:$0xff] %vm2332, %v2125
    %2520 = vst [vmem:[%s2 + $0x5e0] sm:$0xff] %v2129
    %2521 = vst.msk [vmem:[%s2 + $0x5e8] sm:$0xff] %vm2332, %v2131
    %2522 = vst [vmem:[%s2 + $0x5f0] sm:$0xff] %v2135
    %2523 = vst.msk [vmem:[%s2 + $0x5f8] sm:$0xff] %vm2332, %v2137
    %2524 = vst [vmem:[%s2 + $0x600] sm:$0xff] %v2141
    %2525 = vst.msk [vmem:[%s2 + $0x608] sm:$0xff] %vm2332, %v2143
    %2526 = vst [vmem:[%s2 + $0x610] sm:$0xff] %v2147
    %2527 = vst.msk [vmem:[%s2 + $0x618] sm:$0xff] %vm2332, %v2149
    %2528 = vst [vmem:[%s2 + $0x620] sm:$0xff] %v2153
    %2529 = vst.msk [vmem:[%s2 + $0x628] sm:$0xff] %vm2332, %v2155
    %2530 = vst [vmem:[%s2 + $0x630] sm:$0xff] %v2159
    %2531 = vst.msk [vmem:[%s2 + $0x638] sm:$0xff] %vm2332, %v2161
    %2532 = vst [vmem:[%s2 + $0x640] sm:$0xff] %v2165
    %2533 = vst.msk [vmem:[%s2 + $0x648] sm:$0xff] %vm2332, %v2167
    %2534 = vst [vmem:[%s2 + $0x650] sm:$0xff] %v2171
    %2535 = vst.msk [vmem:[%s2 + $0x658] sm:$0xff] %vm2332, %v2173
    %2536 = vst [vmem:[%s2 + $0x660] sm:$0xff] %v2177
    %2537 = vst.msk [vmem:[%s2 + $0x668] sm:$0xff] %vm2332, %v2179
    %2538 = vst [vmem:[%s2 + $0x670] sm:$0xff] %v2183
    %2539 = vst.msk [vmem:[%s2 + $0x678] sm:$0xff] %vm2332, %v2185
    %2540 = vst [vmem:[%s2 + $0x680] sm:$0xff] %v2189
    %2541 = vst.msk [vmem:[%s2 + $0x688] sm:$0xff] %vm2332, %v2191
    %2542 = vst [vmem:[%s2 + $0x690] sm:$0xff] %v2195
    %2543 = vst.msk [vmem:[%s2 + $0x698] sm:$0xff] %vm2332, %v2197
    %2544 = vst [vmem:[%s2 + $0x6a0] sm:$0xff] %v2201
    %2545 = vst.msk [vmem:[%s2 + $0x6a8] sm:$0xff] %vm2332, %v2203
    %2546 = vst [vmem:[%s2 + $0x6b0] sm:$0xff] %v2207
    %2547 = vst.msk [vmem:[%s2 + $0x6b8] sm:$0xff] %vm2332, %v2209
    %2548 = vst [vmem:[%s2 + $0x6c0] sm:$0xff] %v2213
    %2549 = vst.msk [vmem:[%s2 + $0x6c8] sm:$0xff] %vm2332, %v2215
    %2550 = vst [vmem:[%s2 + $0x6d0] sm:$0xff] %v2219
    %2551 = vst.msk [vmem:[%s2 + $0x6d8] sm:$0xff] %vm2332, %v2221
    %2552 = vst [vmem:[%s2 + $0x6e0] sm:$0xff] %v2225
    %2553 = vst.msk [vmem:[%s2 + $0x6e8] sm:$0xff] %vm2332, %v2227
    %2554 = vst [vmem:[%s2 + $0x6f0] sm:$0xff] %v2231
    %2555 = vst.msk [vmem:[%s2 + $0x6f8] sm:$0xff] %vm2332, %v2233
    %2556 = vst [vmem:[%s2 + $0x700] sm:$0xff] %v2237
    %2557 = vst.msk [vmem:[%s2 + $0x708] sm:$0xff] %vm2332, %v2239
    %2558 = vst [vmem:[%s2 + $0x710] sm:$0xff] %v2243
    %2559 = vst.msk [vmem:[%s2 + $0x718] sm:$0xff] %vm2332, %v2245
    %2560 = vst [vmem:[%s2 + $0x720] sm:$0xff] %v2249
    %2561 = vst.msk [vmem:[%s2 + $0x728] sm:$0xff] %vm2332, %v2251
    %2562 = vst [vmem:[%s2 + $0x730] sm:$0xff] %v2255
    %2563 = vst.msk [vmem:[%s2 + $0x738] sm:$0xff] %vm2332, %v2257
    %2564 = vst [vmem:[%s2 + $0x740] sm:$0xff] %v2261
    %2565 = vst.msk [vmem:[%s2 + $0x748] sm:$0xff] %vm2332, %v2263
    %2566 = vst [vmem:[%s2 + $0x750] sm:$0xff] %v2267
    %2567 = vst.msk [vmem:[%s2 + $0x758] sm:$0xff] %vm2332, %v2269
    %2568 = vst [vmem:[%s2 + $0x760] sm:$0xff] %v2273
    %2569 = vst.msk [vmem:[%s2 + $0x768] sm:$0xff] %vm2332, %v2275
    %2570 = vst [vmem:[%s2 + $0x770] sm:$0xff] %v2279
    %2571 = vst.msk [vmem:[%s2 + $0x778] sm:$0xff] %vm2332, %v2281
    %2572 = vst [vmem:[%s2 + $0x780] sm:$0xff] %v2285
    %2573 = vst.msk [vmem:[%s2 + $0x788] sm:$0xff] %vm2332, %v2287
    %2574 = vst [vmem:[%s2 + $0x790] sm:$0xff] %v2291
    %2575 = vst.msk [vmem:[%s2 + $0x798] sm:$0xff] %vm2332, %v2293
    %2576 = vst [vmem:[%s2 + $0x7a0] sm:$0xff] %v2297
    %2577 = vst.msk [vmem:[%s2 + $0x7a8] sm:$0xff] %vm2332, %v2299
    %2578 = vst [vmem:[%s2 + $0x7b0] sm:$0xff] %v2303
    %2579 = vst.msk [vmem:[%s2 + $0x7b8] sm:$0xff] %vm2332, %v2305
    %2580 = vst [vmem:[%s2 + $0x7c0] sm:$0xff] %v2309
    %2581 = vst.msk [vmem:[%s2 + $0x7c8] sm:$0xff] %vm2332, %v2311
    %2582 = vst [vmem:[%s2 + $0x7d0] sm:$0xff] %v2315
    %2583 = vst.msk [vmem:[%s2 + $0x7d8] sm:$0xff] %vm2332, %v2317
    %2584 = vst [vmem:[%s2 + $0x7e0] sm:$0xff] %v2321
    %2585 = vst.msk [vmem:[%s2 + $0x7e8] sm:$0xff] %vm2332, %v2323
    %2586 = vst [vmem:[%s2 + $0x7f0] sm:$0xff] %v2327
    %2587 = vst.msk [vmem:[%s2 + $0x7f8] sm:$0xff] %vm2332, %v2329
    // Predicated region
    $region14: #{tpu_custom_call.1} parent=1 // pred_check
      _
    $region15: #{tpu_custom_call.1} parent=1 // pred_check_branch
      %2589 = sbr.rel (0) target = $region17
    $region16: #{tpu_custom_call.1} parent=1 // pred_region
      _
    $region17: #{tpu_custom_call.1} parent=1 // pred_fallthru
      _
    // Predicated region
    $region18: #{tpu_custom_call.1} parent=1 // pred_check
      _
    $region19: #{tpu_custom_call.1} parent=1 // pred_check_branch
      %2591 = sbr.rel (0) target = $region21
    $region20: #{tpu_custom_call.1} parent=1 // pred_region
      _
    $region21: #{tpu_custom_call.1} parent=1 // pred_fallthru
      _
    %2592 = vsyncpa [#allocation3], 1

</llo_original>
